<compile_context>
chip_gen: v7x
topology: tpu7x:2x2x1
jax: 0.10.0
libtpu: 0.0.40
codegen_flags: <defaults>
</compile_context>

<pallas_src>
import math

import jax
import jax.numpy as jnp
from jax.experimental import pallas as pl
from jax.experimental.pallas import tpu as pltpu


# ----------------------------- in-kernel helpers -----------------------------

def _sigmoid(x):
    # 1 / (1 + exp(-x)) with the divide pushed onto the EUP (vrcp).
    return pl.reciprocal(1.0 + jnp.exp(-x), approx=True)


def _silu(x):
    return x * _sigmoid(x)


def _softplus(x):
    # numerically stable softplus (matches F.softplus for the fp32 range)
    return jnp.maximum(x, 0.0) + jnp.log(1.0 + jnp.exp(-jnp.abs(x)))


def _layernorm(x, w, b, eps=1e-5):
    mean = jnp.mean(x, axis=-1, keepdims=True)
    c = x - mean
    var = jnp.mean(c * c, axis=-1, keepdims=True)
    return c * jax.lax.rsqrt(var + eps) * w + b


# ------------------------------- Mamba block kernel --------------------------

def mamba_block_kernel(
    hid_ref, res_ref,                          # (TL, D) f32 (batch squeezed)
    norm_w_ref, norm_b_ref,                    # (1, D) f32
    in_wT_ref,                                 # (D, 2*d_inner) bf16   [x | z]
    conv_wT_ref, conv_b_ref,                   # (d_conv, d_inner), (1, d_inner) f32
    xp_wT_ref,                                 # (d_inner, dt_rank+2*d_state) bf16 [dt|B|C]
    dt_wT_ref, dt_b_ref,                       # (dt_rank, d_inner) bf16, (1, d_inner) f32
    A_logT_ref, D_ref,                         # (d_state, d_inner), (1, d_inner) f32
    out_wT_ref,                                # (d_inner, D) bf16
    hid_out_ref, res_out_ref,                  # (TL, D) f32
    h_scr,                                     # (d_state, d_inner) f32: scan state carry
    conv_scr,                                  # (d_conv-1+TL, d_inner) f32: conv window
    dA_scr,                                    # (TL, d_state, d_inner) f32
    bh_scr,                                    # (TL, d_state, d_inner) f32: dB*u, then h_t
):
    TL, _ = hid_ref.shape
    d_state, d_inner = A_logT_ref.shape
    d_conv = conv_wT_ref.shape[0]
    dt_rank = dt_wT_ref.shape[0]
    c = pl.program_id(1)

    # --- reset carried state at the first chunk of every batch row -----------
    @pl.when(c == 0)
    def _():
        h_scr[...] = jnp.zeros_like(h_scr)
        conv_scr[0:d_conv - 1, :] = jnp.zeros((d_conv - 1, d_inner), jnp.float32)

    # --- block residual add + pre-norm ---------------------------------------
    res_new = hid_ref[...] + res_ref[...]
    res_out_ref[...] = res_new
    xn = _layernorm(res_new, norm_w_ref[...], norm_b_ref[...])

    # --- fused in_proj (x | z), bf16 MXU with f32 accumulation ----------------
    xz = jnp.dot(xn.astype(jnp.bfloat16), in_wT_ref[...],
                 preferred_element_type=jnp.float32)          # (TL, 2*d_inner)
    x = xz[:, :d_inner]
    z = xz[:, d_inner:]

    # --- causal depthwise conv1d (window scratch carries the previous tail) --
    conv_scr[d_conv - 1:, :] = x
    conv_w = conv_wT_ref[...]
    acc = jnp.zeros((TL, d_inner), jnp.float32)
    for k in range(d_conv):                                   # d_conv is tiny (4)
        acc = acc + conv_scr[k:k + TL, :] * conv_w[k:k + 1, :]
    u = _silu(acc + conv_b_ref[...])                          # (TL, d_inner)

    # save last d_conv-1 pre-activation rows for the next chunk (TL >= d_conv-1)
    tail = conv_scr[TL:TL + d_conv - 1, :]
    conv_scr[0:d_conv - 1, :] = tail

    # --- fused x_proj -> (dt_low | B | C) -------------------------------------
    dbc = jnp.dot(u.astype(jnp.bfloat16), xp_wT_ref[...],
                  preferred_element_type=jnp.float32)         # (TL, dt_rank+2*d_state)
    dt_low = dbc[:, :dt_rank]
    Bmat = dbc[:, dt_rank:dt_rank + d_state]                  # (TL, d_state)
    Cmat = dbc[:, dt_rank + d_state:]                         # (TL, d_state)

    dt = jnp.dot(dt_low.astype(jnp.bfloat16), dt_wT_ref[...],
                 preferred_element_type=jnp.float32) + dt_b_ref[...]
    dt = _softplus(dt)                                        # (TL, d_inner) f32

    # --- selective scan over the chunk ----------------------------------------
    A_T = -jnp.exp(A_logT_ref[...])                           # (d_state, d_inner)
    # batched transcendentals: one chunk-wide exp instead of TL tiny ones
    dA_scr[...] = jnp.exp(dt[:, None, :] * A_T[None, :, :])   # (TL, d_state, d_inner)
    bh_scr[...] = (dt * u)[:, None, :] * Bmat[:, :, None]     # dB * u

    def scan_body(t, h):
        h = dA_scr[t] * h + bh_scr[t]                         # (d_state, d_inner)
        bh_scr[t] = h                                         # reuse buffer: h_t for C-reduce
        return h

    h_final = jax.lax.fori_loop(0, TL, scan_body, h_scr[...])
    h_scr[...] = h_final                                      # carry state to next chunk

    # y_t = sum_s h_t[s, :] * C_t[s]  — one vectorized cross-sublane reduce
    y = jnp.sum(bh_scr[...] * Cmat[:, :, None], axis=1)       # (TL, d_inner)
    y = y + u * D_ref[...]                                    # D * u skip term
    y = y * _silu(z)                                          # output gating

    # --- out_proj --------------------------------------------------------------
    hid_out_ref[...] = jnp.dot(y.astype(jnp.bfloat16), out_wT_ref[...],
                               preferred_element_type=jnp.float32)


# ------------------------------- final add + LayerNorm ------------------------

def add_norm_kernel(hid_ref, res_ref, w_ref, b_ref, out_ref):
    x = hid_ref[...] + res_ref[...]
    out_ref[...] = _layernorm(x, w_ref[...], b_ref[...])


# ------------------------------- wrappers -------------------------------------

_PARAM_ORDER = (
    "norm_w", "norm_b", "in_wT", "conv_wT", "conv_b",
    "xp_wT", "dt_wT", "dt_b", "A_logT", "Dp", "out_wT",
)


def _divisor_tile(n, target):
    """Largest tile <= target that divides n and is a multiple of 8 (or n itself)."""
    if n <= target:
        return n
    for t in range(target, 7, -1):
        if n % t == 0 and t % 8 == 0:
            return t
    return n


def _pick_seq_tile(L, d_state, d_inner, target=128, scan_budget_bytes=16 << 20):
    # cap TL so the two (TL, d_state, d_inner) f32 scan scratches fit the budget
    per_row = 2 * d_state * d_inner * 4
    cap = max(8, (scan_budget_bytes // per_row) // 8 * 8)
    return _divisor_tile(L, max(8, min(target, cap)))


def mamba_block(hidden, residual, p, *, seq_tile=128):
    B, L, D = hidden.shape
    d_state, d_inner = p["A_logT"].shape
    d_conv = p["conv_wT"].shape[0]
    TL = _pick_seq_tile(L, d_state, d_inner, target=seq_tile)
    assert L % TL == 0 and TL >= d_conv - 1
    n_chunks = L // TL

    seq_spec = pl.BlockSpec((None, TL, D), lambda b, c: (b, c, 0))

    def full_spec(arr):
        return pl.BlockSpec(arr.shape, lambda b, c, nd=arr.ndim: (0,) * nd)

    params = [p[k] for k in _PARAM_ORDER]
    in_specs = [seq_spec, seq_spec] + [full_spec(a) for a in params]
    out_specs = [pl.BlockSpec((None, TL, D), lambda b, c: (b, c, 0)),
                 pl.BlockSpec((None, TL, D), lambda b, c: (b, c, 0))]
    out_shape = [jax.ShapeDtypeStruct((B, L, D), jnp.float32),
                 jax.ShapeDtypeStruct((B, L, D), jnp.float32)]

    scratch_shapes = [
        pltpu.VMEM((d_state, d_inner), jnp.float32),             # h carry
        pltpu.VMEM((TL + d_conv - 1, d_inner), jnp.float32),     # conv window
        pltpu.VMEM((TL, d_state, d_inner), jnp.float32),         # dA
        pltpu.VMEM((TL, d_state, d_inner), jnp.float32),         # dB*u / h_t
    ]

    # explicit scoped-VMEM limit sized from actual blocks (x2 double-buffer) + scratch
    io_bytes = 2 * (2 + 2) * TL * D * 4
    w_bytes = 2 * sum(int(a.size) * a.dtype.itemsize for a in params)
    scr_bytes = (d_state * d_inner + (TL + d_conv - 1) * d_inner
                 + 2 * TL * d_state * d_inner) * 4
    vmem_bytes = min(100 << 20, max(32 << 20, int(1.5 * (io_bytes + w_bytes + scr_bytes))))

    grid_spec = pltpu.PrefetchScalarGridSpec(
        num_scalar_prefetch=0,
        grid=(B, n_chunks),
        in_specs=in_specs,
        out_specs=out_specs,
        scratch_shapes=scratch_shapes,
    )
    hid_out, res_out = pl.pallas_call(
        mamba_block_kernel,
        grid_spec=grid_spec,
        out_shape=out_shape,
        compiler_params=pltpu.CompilerParams(
            dimension_semantics=("parallel", "arbitrary"),   # batch across TCs, seq sequential
            vmem_limit_bytes=vmem_bytes,
        ),
    )(hidden, residual, *params)
    return hid_out, res_out


def add_norm(hidden, residual, w, b, *, row_tile=512):
    B, L, D = hidden.shape
    R = B * L
    h2 = hidden.reshape(R, D)
    r2 = residual.reshape(R, D)
    TR = _divisor_tile(R, row_tile)
    out = pl.pallas_call(
        add_norm_kernel,
        grid=(R // TR,),
        in_specs=[pl.BlockSpec((TR, D), lambda i: (i, 0)),
                  pl.BlockSpec((TR, D), lambda i: (i, 0)),
                  pl.BlockSpec((1, D), lambda i: (0, 0)),
                  pl.BlockSpec((1, D), lambda i: (0, 0))],
        out_specs=pl.BlockSpec((TR, D), lambda i: (i, 0)),
        out_shape=jax.ShapeDtypeStruct((R, D), jnp.float32),
        compiler_params=pltpu.CompilerParams(dimension_semantics=("parallel",)),
    )(h2, r2, w, b)
    return out.reshape(B, L, D)


def mixer_model_forward(input_ids, params):
    emb, layers, nfw, nfb = params
    hidden = jnp.take(emb, input_ids, axis=0)        # embedding lookup (glue)
    residual = jnp.zeros_like(hidden)                # residual=None -> identity add
    for lp in layers:
        hidden, residual = mamba_block(hidden, residual, lp)
    return add_norm(hidden, residual, nfw, nfb)      # non-fused path of MixerModel


# ------------------------------- parameter init --------------------------------

def init_params(key, vocab_size, d_model, n_layer, d_state=16, d_conv=4, expand=2):
    d_inner = expand * d_model
    dt_rank = math.ceil(d_model / 16)
    keys = jax.random.split(key, 1 + n_layer)
    emb = 0.02 * jax.random.normal(keys[0], (vocab_size, d_model), jnp.float32)

    layers = []
    for i in range(n_layer):
        ks = jax.random.split(keys[1 + i], 8)
        s_in = 1.0 / math.sqrt(d_model)
        s_inner = 1.0 / math.sqrt(d_inner)
        in_x = s_in * jax.random.normal(ks[0], (d_model, d_inner), jnp.float32)
        in_z = s_in * jax.random.normal(ks[1], (d_model, d_inner), jnp.float32)
        xp_dt = s_inner * jax.random.normal(ks[3], (d_inner, dt_rank), jnp.float32)
        xp_B = s_inner * jax.random.normal(ks[4], (d_inner, d_state), jnp.float32)
        xp_C = s_inner * jax.random.normal(ks[5], (d_inner, d_state), jnp.float32)
        layer = dict(
            norm_w=jnp.ones((1, d_model), jnp.float32),
            norm_b=jnp.zeros((1, d_model), jnp.float32),
            # fused (x | z) in_proj weight, bf16 for the MXU
            in_wT=jnp.concatenate([in_x, in_z], axis=1).astype(jnp.bfloat16),
            conv_wT=(1.0 / math.sqrt(d_conv)) * jax.random.normal(
                ks[2], (d_conv, d_inner), jnp.float32),
            conv_b=jnp.zeros((1, d_inner), jnp.float32),
            # fused (dt | B | C) x_proj weight, bf16
            xp_wT=jnp.concatenate([xp_dt, xp_B, xp_C], axis=1).astype(jnp.bfloat16),
            dt_wT=((dt_rank ** -0.5) * jax.random.normal(
                ks[6], (dt_rank, d_inner), jnp.float32)).astype(jnp.bfloat16),
            # inverse-softplus of dt ~= 0.01 (Mamba-style dt bias init)
            dt_b=jnp.log(jnp.expm1(0.01 * jnp.ones((1, d_inner), jnp.float32))),
            # S4D-real init: A[c, s] = s+1  -> stored transposed as (d_state, d_inner)
            A_logT=jnp.log(jnp.broadcast_to(
                jnp.arange(1, d_state + 1, dtype=jnp.float32)[:, None],
                (d_state, d_inner))),
            Dp=jnp.ones((1, d_inner), jnp.float32),
            out_wT=((0.02 / math.sqrt(n_layer)) * jax.random.normal(
                ks[7], (d_inner, d_model), jnp.float32)).astype(jnp.bfloat16),
        )
        layers.append(layer)

    norm_f_w = jnp.ones((1, d_model), jnp.float32)
    norm_f_b = jnp.zeros((1, d_model), jnp.float32)
    return emb, layers, norm_f_w, norm_f_b


# ------------------------------- main ------------------------------------------

if __name__ == "__main__":
    B, L = 2, 8
    d_model, n_layer, vocab_size = 32, 2, 64

    key = jax.random.PRNGKey(0)
    pkey, ikey = jax.random.split(key)
    params = init_params(pkey, vocab_size, d_model, n_layer)
    input_ids = jax.random.randint(ikey, (B, L), 0, vocab_size, dtype=jnp.int32)

    out = mixer_model_forward(input_ids, params)
    out = jax.block_until_ready(out)

    assert out.shape == (B, L, d_model), out.shape
    assert bool(jnp.all(jnp.isfinite(out)))
    print("KERNEL_OK")
</pallas_src>

<mosaic_0001>
module attributes {stable_mosaic.version = 11 : i64} {
  func.func @mamba_block_kernel(%arg0: i32, %arg1: i32, %arg2: memref<1x8x32xf32, #tpu.memory_space<vmem>>, %arg3: memref<1x8x32xf32, #tpu.memory_space<vmem>>, %arg4: memref<1x32xf32, #tpu.memory_space<vmem>>, %arg5: memref<1x32xf32, #tpu.memory_space<vmem>>, %arg6: memref<32x128xbf16, #tpu.memory_space<vmem>>, %arg7: memref<4x64xf32, #tpu.memory_space<vmem>>, %arg8: memref<1x64xf32, #tpu.memory_space<vmem>>, %arg9: memref<64x34xbf16, #tpu.memory_space<vmem>>, %arg10: memref<2x64xbf16, #tpu.memory_space<vmem>>, %arg11: memref<1x64xf32, #tpu.memory_space<vmem>>, %arg12: memref<16x64xf32, #tpu.memory_space<vmem>>, %arg13: memref<1x64xf32, #tpu.memory_space<vmem>>, %arg14: memref<64x32xbf16, #tpu.memory_space<vmem>>, %arg15: memref<1x8x32xf32, #tpu.memory_space<vmem>>, %arg16: memref<1x8x32xf32, #tpu.memory_space<vmem>>, %arg17: memref<16x64xf32, #tpu.memory_space<vmem>>, %arg18: memref<11x64xf32, #tpu.memory_space<vmem>>, %arg19: memref<8x16x64xf32, #tpu.memory_space<vmem>>, %arg20: memref<8x16x64xf32, #tpu.memory_space<vmem>>) attributes {dimension_semantics = [#tpu.dimension_semantics<parallel>, #tpu.dimension_semantics<arbitrary>], iteration_bounds = array<i64: 2, 1>, scalar_prefetch = 0 : i64, scratch_operands = 4 : i64, tpu.core_type = #tpu.core_type<tc>, window_params = [{transform_indices = @transform_0, window_bounds = array<i64: 1, 8, 32>}, {transform_indices = @transform_1, window_bounds = array<i64: 1, 8, 32>}, {pipeline_mode = #tpu.pipeline_mode<synchronous>, transform_indices = @transform_2, window_bounds = array<i64: 1, 32>}, {pipeline_mode = #tpu.pipeline_mode<synchronous>, transform_indices = @transform_3, window_bounds = array<i64: 1, 32>}, {pipeline_mode = #tpu.pipeline_mode<synchronous>, transform_indices = @transform_4, window_bounds = array<i64: 32, 128>}, {pipeline_mode = #tpu.pipeline_mode<synchronous>, transform_indices = @transform_5, window_bounds = array<i64: 4, 64>}, {pipeline_mode = #tpu.pipeline_mode<synchronous>, transform_indices = @transform_6, window_bounds = array<i64: 1, 64>}, {pipeline_mode = #tpu.pipeline_mode<synchronous>, transform_indices = @transform_7, window_bounds = array<i64: 64, 34>}, {pipeline_mode = #tpu.pipeline_mode<synchronous>, transform_indices = @transform_8, window_bounds = array<i64: 2, 64>}, {pipeline_mode = #tpu.pipeline_mode<synchronous>, transform_indices = @transform_9, window_bounds = array<i64: 1, 64>}, {pipeline_mode = #tpu.pipeline_mode<synchronous>, transform_indices = @transform_10, window_bounds = array<i64: 16, 64>}, {pipeline_mode = #tpu.pipeline_mode<synchronous>, transform_indices = @transform_11, window_bounds = array<i64: 1, 64>}, {pipeline_mode = #tpu.pipeline_mode<synchronous>, transform_indices = @transform_12, window_bounds = array<i64: 64, 32>}, {transform_indices = @transform_13, window_bounds = array<i64: 1, 8, 32>}, {transform_indices = @transform_14, window_bounds = array<i64: 1, 8, 32>}]} {
    %c0_i32 = arith.constant 0 : i32
    %0 = arith.cmpi eq, %arg1, %c0_i32 : i32
    %1 = arith.extui %0 : i1 to i32
    %c0_i32_0 = arith.constant 0 : i32
    %2 = arith.cmpi ne, %1, %c0_i32_0 : i32
    scf.if %2 {
      %cst_77 = arith.constant 0.000000e+00 : f32
      %140 = vector.broadcast %cst_77 : f32 to vector<16x64xf32>
      %c0_78 = arith.constant 0 : index
      %c0_79 = arith.constant 0 : index
      %141 = vector.load %arg17[%c0_78, %c0_79] : memref<16x64xf32, #tpu.memory_space<vmem>>, vector<16x64xf32>
      tpu.vector_store %arg17[%c0_78, %c0_79], %140 {strides = array<i32>} : memref<16x64xf32, #tpu.memory_space<vmem>>, vector<16x64xf32>,
      %cst_80 = arith.constant 0.000000e+00 : f32
      %142 = vector.broadcast %cst_80 : f32 to vector<3x64xf32>
      %c0_81 = arith.constant 0 : index
      %c0_82 = arith.constant 0 : index
      %143 = vector.load %arg18[%c0_81, %c0_82] : memref<11x64xf32, #tpu.memory_space<vmem>>, vector<3x64xf32>
      tpu.vector_store %arg18[%c0_81, %c0_82], %142 {strides = array<i32>} : memref<11x64xf32, #tpu.memory_space<vmem>>, vector<3x64xf32>,
    } else {
    }
    %c0 = arith.constant 0 : index
    %c0_1 = arith.constant 0 : index
    %c0_2 = arith.constant 0 : index
    %3 = vector.load %arg2[%c0, %c0_1, %c0_2] : memref<1x8x32xf32, #tpu.memory_space<vmem>>, vector<1x8x32xf32>
    %4 = vector.shape_cast %3 : vector<1x8x32xf32> to vector<8x32xf32>
    %c0_3 = arith.constant 0 : index
    %c0_4 = arith.constant 0 : index
    %c0_5 = arith.constant 0 : index
    %5 = vector.load %arg3[%c0_3, %c0_4, %c0_5] : memref<1x8x32xf32, #tpu.memory_space<vmem>>, vector<1x8x32xf32>
    %6 = vector.shape_cast %5 : vector<1x8x32xf32> to vector<8x32xf32>
    %7 = arith.addf %4, %6 : vector<8x32xf32>
    %c0_6 = arith.constant 0 : index
    %c0_7 = arith.constant 0 : index
    %c0_8 = arith.constant 0 : index
    %8 = vector.load %arg16[%c0_6, %c0_7, %c0_8] : memref<1x8x32xf32, #tpu.memory_space<vmem>>, vector<1x8x32xf32>
    %9 = vector.shape_cast %8 : vector<1x8x32xf32> to vector<8x32xf32>
    %10 = vector.shape_cast %7 : vector<8x32xf32> to vector<1x8x32xf32>
    tpu.vector_store %arg16[%c0_6, %c0_7, %c0_8], %10 {strides = array<i32>} : memref<1x8x32xf32, #tpu.memory_space<vmem>>, vector<1x8x32xf32>,
    %c0_9 = arith.constant 0 : index
    %c0_10 = arith.constant 0 : index
    %11 = vector.load %arg4[%c0_9, %c0_10] : memref<1x32xf32, #tpu.memory_space<vmem>>, vector<1x32xf32>
    %c0_11 = arith.constant 0 : index
    %c0_12 = arith.constant 0 : index
    %12 = vector.load %arg5[%c0_11, %c0_12] : memref<1x32xf32, #tpu.memory_space<vmem>>, vector<1x32xf32>
    %cst = arith.constant dense<0.000000e+00> : vector<8xf32>
    %13 = vector.multi_reduction <add>, %7, %cst [1] : vector<8x32xf32> to vector<8xf32>
    %14 = vector.shape_cast %13 : vector<8xf32> to vector<8x1xf32>
    %cst_13 = arith.constant 3.200000e+01 : f32
    %15 = vector.broadcast %cst_13 : f32 to vector<8x1xf32>
    %16 = arith.divf %14, %15 : vector<8x1xf32>
    %17 = vector.broadcast %16 : vector<8x1xf32> to vector<8x32xf32>
    %18 = arith.subf %7, %17 : vector<8x32xf32>
    %19 = arith.mulf %18, %18 : vector<8x32xf32>
    %cst_14 = arith.constant dense<0.000000e+00> : vector<8xf32>
    %20 = vector.multi_reduction <add>, %19, %cst_14 [1] : vector<8x32xf32> to vector<8xf32>
    %21 = vector.shape_cast %20 : vector<8xf32> to vector<8x1xf32>
    %cst_15 = arith.constant 3.200000e+01 : f32
    %22 = vector.broadcast %cst_15 : f32 to vector<8x1xf32>
    %23 = arith.divf %21, %22 : vector<8x1xf32>
    %cst_16 = arith.constant 9.99999974E-6 : f32
    %24 = vector.broadcast %cst_16 : f32 to vector<8x1xf32>
    %25 = arith.addf %23, %24 : vector<8x1xf32>
    %26 = math.rsqrt %25 : vector<8x1xf32>
    %27 = vector.broadcast %26 : vector<8x1xf32> to vector<8x32xf32>
    %28 = arith.mulf %18, %27 : vector<8x32xf32>
    %29 = vector.broadcast %11 : vector<1x32xf32> to vector<8x32xf32>
    %30 = arith.mulf %28, %29 : vector<8x32xf32>
    %31 = vector.broadcast %12 : vector<1x32xf32> to vector<8x32xf32>
    %32 = arith.addf %30, %31 : vector<8x32xf32>
    %33 = arith.truncf %32 : vector<8x32xf32> to vector<8x32xbf16>
    %c0_17 = arith.constant 0 : index
    %c0_18 = arith.constant 0 : index
    %34 = vector.load %arg6[%c0_17, %c0_18] : memref<32x128xbf16, #tpu.memory_space<vmem>>, vector<32x128xbf16>
    %cst_19 = arith.constant dense<0.000000e+00> : vector<8x128xf32>
    %35 = tpu.matmul %33, %34, %cst_19 {dimension_numbers = #tpu.dot_dimension_numbers<[1], [0], [0], [1], [0, 0, 1, 1], [], []>} : vector<8x32xbf16>, vector<32x128xbf16>, vector<8x128xf32> -> vector<8x128xf32>
    %36 = vector.extract_strided_slice %35 {offsets = [0, 0], sizes = [8, 64], strides = [1, 1]} : vector<8x128xf32> to vector<8x64xf32>
    %37 = vector.extract_strided_slice %35 {offsets = [0, 64], sizes = [8, 64], strides = [1, 1]} : vector<8x128xf32> to vector<8x64xf32>
    %c3 = arith.constant 3 : index
    %c0_20 = arith.constant 0 : index
    %38 = vector.load %arg18[%c3, %c0_20] : memref<11x64xf32, #tpu.memory_space<vmem>>, vector<8x64xf32>
    tpu.vector_store %arg18[%c3, %c0_20], %36 {strides = array<i32>} : memref<11x64xf32, #tpu.memory_space<vmem>>, vector<8x64xf32>,
    %c0_21 = arith.constant 0 : index
    %c0_22 = arith.constant 0 : index
    %39 = vector.load %arg7[%c0_21, %c0_22] : memref<4x64xf32, #tpu.memory_space<vmem>>, vector<4x64xf32>
    %cst_23 = arith.constant 0.000000e+00 : f32
    %40 = vector.broadcast %cst_23 : f32 to vector<8x64xf32>
    %c0_24 = arith.constant 0 : index
    %c0_25 = arith.constant 0 : index
    %41 = vector.load %arg18[%c0_24, %c0_25] : memref<11x64xf32, #tpu.memory_space<vmem>>, vector<8x64xf32>
    %42 = vector.extract_strided_slice %39 {offsets = [0, 0], sizes = [1, 64], strides = [1, 1]} : vector<4x64xf32> to vector<1x64xf32>
    %43 = vector.broadcast %42 : vector<1x64xf32> to vector<8x64xf32>
    %44 = arith.mulf %41, %43 : vector<8x64xf32>
    %45 = arith.addf %40, %44 : vector<8x64xf32>
    %c1 = arith.constant 1 : index
    %c0_26 = arith.constant 0 : index
    %46 = vector.load %arg18[%c1, %c0_26] : memref<11x64xf32, #tpu.memory_space<vmem>>, vector<8x64xf32>
    %47 = vector.extract_strided_slice %39 {offsets = [1, 0], sizes = [1, 64], strides = [1, 1]} : vector<4x64xf32> to vector<1x64xf32>
    %48 = vector.broadcast %47 : vector<1x64xf32> to vector<8x64xf32>
    %49 = arith.mulf %46, %48 : vector<8x64xf32>
    %50 = arith.addf %45, %49 : vector<8x64xf32>
    %c2 = arith.constant 2 : index
    %c0_27 = arith.constant 0 : index
    %51 = vector.load %arg18[%c2, %c0_27] : memref<11x64xf32, #tpu.memory_space<vmem>>, vector<8x64xf32>
    %52 = vector.extract_strided_slice %39 {offsets = [2, 0], sizes = [1, 64], strides = [1, 1]} : vector<4x64xf32> to vector<1x64xf32>
    %53 = vector.broadcast %52 : vector<1x64xf32> to vector<8x64xf32>
    %54 = arith.mulf %51, %53 : vector<8x64xf32>
    %55 = arith.addf %50, %54 : vector<8x64xf32>
    %c3_28 = arith.constant 3 : index
    %c0_29 = arith.constant 0 : index
    %56 = vector.load %arg18[%c3_28, %c0_29] : memref<11x64xf32, #tpu.memory_space<vmem>>, vector<8x64xf32>
    %57 = vector.extract_strided_slice %39 {offsets = [3, 0], sizes = [1, 64], strides = [1, 1]} : vector<4x64xf32> to vector<1x64xf32>
    %58 = vector.broadcast %57 : vector<1x64xf32> to vector<8x64xf32>
    %59 = arith.mulf %56, %58 : vector<8x64xf32>
    %60 = arith.addf %55, %59 : vector<8x64xf32>
    %c0_30 = arith.constant 0 : index
    %c0_31 = arith.constant 0 : index
    %61 = vector.load %arg8[%c0_30, %c0_31] : memref<1x64xf32, #tpu.memory_space<vmem>>, vector<1x64xf32>
    %62 = vector.broadcast %61 : vector<1x64xf32> to vector<8x64xf32>
    %63 = arith.addf %60, %62 : vector<8x64xf32>
    %cst_32 = arith.constant 0.000000e+00 : f32
    %64 = vector.broadcast %cst_32 : f32 to vector<8x64xf32>
    %65 = arith.subf %64, %63 : vector<8x64xf32>
    %66 = math.exp %65 : vector<8x64xf32>
    %cst_33 = arith.constant 1.000000e+00 : f32
    %67 = vector.broadcast %cst_33 : f32 to vector<8x64xf32>
    %68 = arith.addf %67, %66 : vector<8x64xf32>
    %69 = tpu.reciprocal %68 {approx = true} : vector<8x64xf32> -> vector<8x64xf32>
    %70 = arith.mulf %63, %69 : vector<8x64xf32>
    %c8 = arith.constant 8 : index
    %c0_34 = arith.constant 0 : index
    %71 = vector.load %arg18[%c8, %c0_34] : memref<11x64xf32, #tpu.memory_space<vmem>>, vector<3x64xf32>
    %c0_35 = arith.constant 0 : index
    %c0_36 = arith.constant 0 : index
    %72 = vector.load %arg18[%c0_35, %c0_36] : memref<11x64xf32, #tpu.memory_space<vmem>>, vector<3x64xf32>
    tpu.vector_store %arg18[%c0_35, %c0_36], %71 {strides = array<i32>} : memref<11x64xf32, #tpu.memory_space<vmem>>, vector<3x64xf32>,
    %73 = arith.truncf %70 : vector<8x64xf32> to vector<8x64xbf16>
    %c0_37 = arith.constant 0 : index
    %c0_38 = arith.constant 0 : index
    %74 = vector.load %arg9[%c0_37, %c0_38] : memref<64x34xbf16, #tpu.memory_space<vmem>>, vector<64x34xbf16>
    %cst_39 = arith.constant dense<0.000000e+00> : vector<8x34xf32>
    %75 = tpu.matmul %73, %74, %cst_39 {dimension_numbers = #tpu.dot_dimension_numbers<[1], [0], [0], [1], [0, 0, 1, 1], [], []>} : vector<8x64xbf16>, vector<64x34xbf16>, vector<8x34xf32> -> vector<8x34xf32>
    %76 = vector.extract_strided_slice %75 {offsets = [0, 0], sizes = [8, 2], strides = [1, 1]} : vector<8x34xf32> to vector<8x2xf32>
    %77 = vector.extract_strided_slice %75 {offsets = [0, 2], sizes = [8, 16], strides = [1, 1]} : vector<8x34xf32> to vector<8x16xf32>
    %78 = vector.extract_strided_slice %75 {offsets = [0, 18], sizes = [8, 16], strides = [1, 1]} : vector<8x34xf32> to vector<8x16xf32>
    %79 = arith.truncf %76 : vector<8x2xf32> to vector<8x2xbf16>
    %c0_40 = arith.constant 0 : index
    %c0_41 = arith.constant 0 : index
    %80 = vector.load %arg10[%c0_40, %c0_41] : memref<2x64xbf16, #tpu.memory_space<vmem>>, vector<2x64xbf16>
    %cst_42 = arith.constant dense<0.000000e+00> : vector<8x64xf32>
    %81 = tpu.matmul %79, %80, %cst_42 {dimension_numbers = #tpu.dot_dimension_numbers<[1], [0], [0], [1], [0, 0, 1, 1], [], []>} : vector<8x2xbf16>, vector<2x64xbf16>, vector<8x64xf32> -> vector<8x64xf32>
    %c0_43 = arith.constant 0 : index
    %c0_44 = arith.constant 0 : index
    %82 = vector.load %arg11[%c0_43, %c0_44] : memref<1x64xf32, #tpu.memory_space<vmem>>, vector<1x64xf32>
    %83 = vector.broadcast %82 : vector<1x64xf32> to vector<8x64xf32>
    %84 = arith.addf %81, %83 : vector<8x64xf32>
    %cst_45 = arith.constant 0.000000e+00 : f32
    %85 = vector.broadcast %cst_45 : f32 to vector<8x64xf32>
    %86 = arith.maximumf %84, %85 : vector<8x64xf32>
    %87 = math.absf %84 : vector<8x64xf32>
    %cst_46 = arith.constant 0.000000e+00 : f32
    %88 = vector.broadcast %cst_46 : f32 to vector<8x64xf32>
    %89 = arith.subf %88, %87 : vector<8x64xf32>
    %90 = math.exp %89 : vector<8x64xf32>
    %cst_47 = arith.constant 1.000000e+00 : f32
    %91 = vector.broadcast %cst_47 : f32 to vector<8x64xf32>
    %92 = arith.addf %91, %90 : vector<8x64xf32>
    %93 = math.log %92 : vector<8x64xf32>
    %94 = arith.addf %86, %93 : vector<8x64xf32>
    %c0_48 = arith.constant 0 : index
    %c0_49 = arith.constant 0 : index
    %95 = vector.load %arg12[%c0_48, %c0_49] : memref<16x64xf32, #tpu.memory_space<vmem>>, vector<16x64xf32>
    %96 = math.exp %95 : vector<16x64xf32>
    %cst_50 = arith.constant 0.000000e+00 : f32
    %97 = vector.broadcast %cst_50 : f32 to vector<16x64xf32>
    %98 = arith.subf %97, %96 : vector<16x64xf32>
    %99 = vector.shape_cast %94 : vector<8x64xf32> to vector<8x1x64xf32>
    %100 = vector.shape_cast %98 : vector<16x64xf32> to vector<1x16x64xf32>
    %101 = vector.broadcast %99 : vector<8x1x64xf32> to vector<8x16x64xf32>
    %102 = vector.broadcast %100 : vector<1x16x64xf32> to vector<8x16x64xf32>
    %103 = arith.mulf %101, %102 : vector<8x16x64xf32>
    %104 = math.exp %103 : vector<8x16x64xf32>
    %c0_51 = arith.constant 0 : index
    %c0_52 = arith.constant 0 : index
    %c0_53 = arith.constant 0 : index
    %105 = vector.load %arg19[%c0_51, %c0_52, %c0_53] : memref<8x16x64xf32, #tpu.memory_space<vmem>>, vector<8x16x64xf32>
    tpu.vector_store %arg19[%c0_51, %c0_52, %c0_53], %104 {strides = array<i32>} : memref<8x16x64xf32, #tpu.memory_space<vmem>>, vector<8x16x64xf32>,
    %106 = arith.mulf %94, %70 : vector<8x64xf32>
    %107 = vector.shape_cast %106 : vector<8x64xf32> to vector<8x1x64xf32>
    %108 = vector.shape_cast %77 : vector<8x16xf32> to vector<8x16x1xf32>
    %109 = vector.broadcast %107 : vector<8x1x64xf32> to vector<8x16x64xf32>
    %110 = vector.broadcast %108 : vector<8x16x1xf32> to vector<8x16x64xf32>
    %111 = arith.mulf %109, %110 : vector<8x16x64xf32>
    %c0_54 = arith.constant 0 : index
    %c0_55 = arith.constant 0 : index
    %c0_56 = arith.constant 0 : index
    %112 = vector.load %arg20[%c0_54, %c0_55, %c0_56] : memref<8x16x64xf32, #tpu.memory_space<vmem>>, vector<8x16x64xf32>
    tpu.vector_store %arg20[%c0_54, %c0_55, %c0_56], %111 {strides = array<i32>} : memref<8x16x64xf32, #tpu.memory_space<vmem>>, vector<8x16x64xf32>,
    %c0_57 = arith.constant 0 : index
    %c0_58 = arith.constant 0 : index
    %113 = vector.load %arg17[%c0_57, %c0_58] : memref<16x64xf32, #tpu.memory_space<vmem>>, vector<16x64xf32>
    %c0_i32_59 = arith.constant 0 : i32
    %c8_i32 = arith.constant 8 : i32
    %114 = arith.addi %c0_i32_59, %c8_i32 : i32
    %c1_i32 = arith.constant 1 : i32
    %115 = scf.for %arg21 = %c0_i32_59 to %114 step %c1_i32 iter_args(%arg22 = %113) -> (vector<16x64xf32>)  : i32 {
      %140 = arith.index_cast %arg21 : i32 to index
      %c0_77 = arith.constant 0 : index
      %c0_78 = arith.constant 0 : index
      %141 = vector.load %arg19[%140, %c0_77, %c0_78] : memref<8x16x64xf32, #tpu.memory_space<vmem>>, vector<1x16x64xf32>
      %142 = vector.shape_cast %141 : vector<1x16x64xf32> to vector<16x64xf32>
      %143 = arith.mulf %142, %arg22 : vector<16x64xf32>
      %144 = arith.index_cast %arg21 : i32 to index
      %c0_79 = arith.constant 0 : index
      %c0_80 = arith.constant 0 : index
      %145 = vector.load %arg20[%144, %c0_79, %c0_80] : memref<8x16x64xf32, #tpu.memory_space<vmem>>, vector<1x16x64xf32>
      %146 = vector.shape_cast %145 : vector<1x16x64xf32> to vector<16x64xf32>
      %147 = arith.addf %143, %146 : vector<16x64xf32>
      %148 = arith.index_cast %arg21 : i32 to index
      %c0_81 = arith.constant 0 : index
      %c0_82 = arith.constant 0 : index
      %149 = vector.load %arg20[%148, %c0_81, %c0_82] : memref<8x16x64xf32, #tpu.memory_space<vmem>>, vector<1x16x64xf32>
      %150 = vector.shape_cast %149 : vector<1x16x64xf32> to vector<16x64xf32>
      %151 = vector.shape_cast %147 : vector<16x64xf32> to vector<1x16x64xf32>
      tpu.vector_store %arg20[%148, %c0_81, %c0_82], %151 {strides = array<i32>} : memref<8x16x64xf32, #tpu.memory_space<vmem>>, vector<1x16x64xf32>,
      scf.yield %147 : vector<16x64xf32>
    }
    %c8_i32_60 = arith.constant 8 : i32
    %c0_61 = arith.constant 0 : index
    %c0_62 = arith.constant 0 : index
    %116 = vector.load %arg17[%c0_61, %c0_62] : memref<16x64xf32, #tpu.memory_space<vmem>>, vector<16x64xf32>
    tpu.vector_store %arg17[%c0_61, %c0_62], %115 {strides = array<i32>} : memref<16x64xf32, #tpu.memory_space<vmem>>, vector<16x64xf32>,
    %c0_63 = arith.constant 0 : index
    %c0_64 = arith.constant 0 : index
    %c0_65 = arith.constant 0 : index
    %117 = vector.load %arg20[%c0_63, %c0_64, %c0_65] : memref<8x16x64xf32, #tpu.memory_space<vmem>>, vector<8x16x64xf32>
    %118 = vector.shape_cast %78 : vector<8x16xf32> to vector<8x16x1xf32>
    %119 = vector.broadcast %118 : vector<8x16x1xf32> to vector<8x16x64xf32>
    %120 = arith.mulf %117, %119 : vector<8x16x64xf32>
    %cst_66 = arith.constant dense<0.000000e+00> : vector<8x64xf32>
    %121 = vector.multi_reduction <add>, %120, %cst_66 [1] : vector<8x16x64xf32> to vector<8x64xf32>
    %c0_67 = arith.constant 0 : index
    %c0_68 = arith.constant 0 : index
    %122 = vector.load %arg13[%c0_67, %c0_68] : memref<1x64xf32, #tpu.memory_space<vmem>>, vector<1x64xf32>
    %123 = vector.broadcast %122 : vector<1x64xf32> to vector<8x64xf32>
    %124 = arith.mulf %70, %123 : vector<8x64xf32>
    %125 = arith.addf %121, %124 : vector<8x64xf32>
    %cst_69 = arith.constant 0.000000e+00 : f32
    %126 = vector.broadcast %cst_69 : f32 to vector<8x64xf32>
    %127 = arith.subf %126, %37 : vector<8x64xf32>
    %128 = math.exp %127 : vector<8x64xf32>
    %cst_70 = arith.constant 1.000000e+00 : f32
    %129 = vector.broadcast %cst_70 : f32 to vector<8x64xf32>
    %130 = arith.addf %129, %128 : vector<8x64xf32>
    %131 = tpu.reciprocal %130 {approx = true} : vector<8x64xf32> -> vector<8x64xf32>
    %132 = arith.mulf %37, %131 : vector<8x64xf32>
    %133 = arith.mulf %125, %132 : vector<8x64xf32>
    %134 = arith.truncf %133 : vector<8x64xf32> to vector<8x64xbf16>
    %c0_71 = arith.constant 0 : index
    %c0_72 = arith.constant 0 : index
    %135 = vector.load %arg14[%c0_71, %c0_72] : memref<64x32xbf16, #tpu.memory_space<vmem>>, vector<64x32xbf16>
    %cst_73 = arith.constant dense<0.000000e+00> : vector<8x32xf32>
    %136 = tpu.matmul %134, %135, %cst_73 {dimension_numbers = #tpu.dot_dimension_numbers<[1], [0], [0], [1], [0, 0, 1, 1], [], []>} : vector<8x64xbf16>, vector<64x32xbf16>, vector<8x32xf32> -> vector<8x32xf32>
    %c0_74 = arith.constant 0 : index
    %c0_75 = arith.constant 0 : index
    %c0_76 = arith.constant 0 : index
    %137 = vector.load %arg15[%c0_74, %c0_75, %c0_76] : memref<1x8x32xf32, #tpu.memory_space<vmem>>, vector<1x8x32xf32>
    %138 = vector.shape_cast %137 : vector<1x8x32xf32> to vector<8x32xf32>
    %139 = vector.shape_cast %136 : vector<8x32xf32> to vector<1x8x32xf32>
    tpu.vector_store %arg15[%c0_74, %c0_75, %c0_76], %139 {strides = array<i32>} : memref<1x8x32xf32, #tpu.memory_space<vmem>>, vector<1x8x32xf32>,
    return
  }
  func.func @transform_0(%arg0: i32, %arg1: i32) -> (i32, i32, i32) {
    %c0_i32 = arith.constant 0 : i32
    %c0_i32_0 = arith.constant 0 : i32
    return %arg0, %arg1, %c0_i32 : i32, i32, i32
  }
  func.func @transform_1(%arg0: i32, %arg1: i32) -> (i32, i32, i32) {
    %c0_i32 = arith.constant 0 : i32
    %c0_i32_0 = arith.constant 0 : i32
    return %arg0, %arg1, %c0_i32 : i32, i32, i32
  }
  func.func @transform_2(%arg0: i32, %arg1: i32) -> (i32, i32) {
    %c0_i32 = arith.constant 0 : i32
    %c0_i32_0 = arith.constant 0 : i32
    %c0_i32_1 = arith.constant 0 : i32
    return %c0_i32, %c0_i32_0 : i32, i32
  }
  func.func @transform_3(%arg0: i32, %arg1: i32) -> (i32, i32) {
    %c0_i32 = arith.constant 0 : i32
    %c0_i32_0 = arith.constant 0 : i32
    %c0_i32_1 = arith.constant 0 : i32
    return %c0_i32, %c0_i32_0 : i32, i32
  }
  func.func @transform_4(%arg0: i32, %arg1: i32) -> (i32, i32) {
    %c0_i32 = arith.constant 0 : i32
    %c0_i32_0 = arith.constant 0 : i32
    %c0_i32_1 = arith.constant 0 : i32
    return %c0_i32, %c0_i32_0 : i32, i32
  }
  func.func @transform_5(%arg0: i32, %arg1: i32) -> (i32, i32) {
    %c0_i32 = arith.constant 0 : i32
    %c0_i32_0 = arith.constant 0 : i32
    %c0_i32_1 = arith.constant 0 : i32
    return %c0_i32, %c0_i32_0 : i32, i32
  }
  func.func @transform_6(%arg0: i32, %arg1: i32) -> (i32, i32) {
    %c0_i32 = arith.constant 0 : i32
    %c0_i32_0 = arith.constant 0 : i32
    %c0_i32_1 = arith.constant 0 : i32
    return %c0_i32, %c0_i32_0 : i32, i32
  }
  func.func @transform_7(%arg0: i32, %arg1: i32) -> (i32, i32) {
    %c0_i32 = arith.constant 0 : i32
    %c0_i32_0 = arith.constant 0 : i32
    %c0_i32_1 = arith.constant 0 : i32
    return %c0_i32, %c0_i32_0 : i32, i32
  }
  func.func @transform_8(%arg0: i32, %arg1: i32) -> (i32, i32) {
    %c0_i32 = arith.constant 0 : i32
    %c0_i32_0 = arith.constant 0 : i32
    %c0_i32_1 = arith.constant 0 : i32
    return %c0_i32, %c0_i32_0 : i32, i32
  }
  func.func @transform_9(%arg0: i32, %arg1: i32) -> (i32, i32) {
    %c0_i32 = arith.constant 0 : i32
    %c0_i32_0 = arith.constant 0 : i32
    %c0_i32_1 = arith.constant 0 : i32
    return %c0_i32, %c0_i32_0 : i32, i32
  }
  func.func @transform_10(%arg0: i32, %arg1: i32) -> (i32, i32) {
    %c0_i32 = arith.constant 0 : i32
    %c0_i32_0 = arith.constant 0 : i32
    %c0_i32_1 = arith.constant 0 : i32
    return %c0_i32, %c0_i32_0 : i32, i32
  }
  func.func @transform_11(%arg0: i32, %arg1: i32) -> (i32, i32) {
    %c0_i32 = arith.constant 0 : i32
    %c0_i32_0 = arith.constant 0 : i32
    %c0_i32_1 = arith.constant 0 : i32
    return %c0_i32, %c0_i32_0 : i32, i32
  }
  func.func @transform_12(%arg0: i32, %arg1: i32) -> (i32, i32) {
    %c0_i32 = arith.constant 0 : i32
    %c0_i32_0 = arith.constant 0 : i32
    %c0_i32_1 = arith.constant 0 : i32
    return %c0_i32, %c0_i32_0 : i32, i32
  }
  func.func @transform_13(%arg0: i32, %arg1: i32) -> (i32, i32, i32) {
    %c0_i32 = arith.constant 0 : i32
    %c0_i32_0 = arith.constant 0 : i32
    return %arg0, %arg1, %c0_i32 : i32, i32, i32
  }
  func.func @transform_14(%arg0: i32, %arg1: i32) -> (i32, i32, i32) {
    %c0_i32 = arith.constant 0 : i32
    %c0_i32_0 = arith.constant 0 : i32
    return %arg0, %arg1, %c0_i32 : i32, i32, i32
  }
}

</mosaic_0001>

<llo_original>
// kernel: tpu_custom_call.1
$region0: #{tpu_custom_call.1}
  #allocation0 [shape = 'u32[]', space=smem, size = 0x4, offset = 0x4, fixed_abs, tag = 'smem constant byte address 0x4 - core index']
  #allocation1 [shape = 'u32[144,128]{1,0:T(1,128)}', space=vmem, size = 0x12000, scoped, tag = 'internal scratch']
  #allocation2 [shape = 'f32[16,64]{1,0:T(8,128)}', space=vmem, size = 0x2000, scoped, tag = 'scratch operand']
  #allocation3 [shape = 'f32[11,64]{1,0:T(8,128)}', space=vmem, size = 0x2000, scoped, tag = 'scratch operand']
  #allocation4 [shape = 'f32[8,16,64]{2,1,0:T(8,128)}', space=vmem, size = 0x10000, scoped, tag = 'scratch operand']
  #allocation5 [shape = 'f32[8,16,64]{2,1,0:T(8,128)}', space=vmem, size = 0x10000, scoped, tag = 'scratch operand']
  %s0 = inlined_call_operand.vmem [shape: f32[2,8,32], index: 0, kind: input, shape index: {}]
  %s1 = inlined_call_operand.vmem [shape: f32[2,8,32], index: 1, kind: input, shape index: {}]
  %s2 = inlined_call_operand.vmem [shape: f32[1,32], index: 2, kind: input, shape index: {}]
  %s3 = inlined_call_operand.vmem [shape: f32[1,32], index: 3, kind: input, shape index: {}]
  %s4 = inlined_call_operand.vmem [shape: bf16[32,128], index: 4, kind: input, shape index: {}]
  %s5 = inlined_call_operand.vmem [shape: f32[4,64], index: 5, kind: input, shape index: {}]
  %s6 = inlined_call_operand.vmem [shape: f32[1,64], index: 6, kind: input, shape index: {}]
  %s7 = inlined_call_operand.vmem [shape: bf16[64,34], index: 7, kind: input, shape index: {}]
  %s8 = inlined_call_operand.vmem [shape: bf16[2,64], index: 8, kind: input, shape index: {}]
  %s9 = inlined_call_operand.vmem [shape: f32[1,64], index: 9, kind: input, shape index: {}]
  %s10 = inlined_call_operand.vmem [shape: f32[16,64], index: 10, kind: input, shape index: {}]
  %s11 = inlined_call_operand.vmem [shape: f32[1,64], index: 11, kind: input, shape index: {}]
  %s12 = inlined_call_operand.vmem [shape: bf16[64,32], index: 12, kind: input, shape index: {}]
  %s13 = inlined_call_operand.hbm [shape: f32[2,8,32], index: 13, kind: output, shape index: {0}]
  %s14 = inlined_call_operand.hbm [shape: f32[2,8,32], index: 14, kind: output, shape index: {1}]
  %15 = xla_tuple %s13, %s14
  %s16 = sld [smem:[#allocation0]]
  $region104: #{tpu_custom_call.1} parent=0
    _
  %s18 = ssub.s32 1, %s16
  %s19 = scalar_select 0, %s18, %s16
  $region1: #{tpu_custom_call.1} parent=0
    #allocation6 [shape = 'u8[8192]{0}', space=vmem, size = 0x2000, scoped, tag = 'output window, operand 0']
    #allocation7 [shape = 's32[2]{0}', space=sflag, size = 0x8, scoped, tag = 'scoped memory for tpu_custom_call.1']
    #allocation8 [shape = 'u8[8192]{0}', space=vmem, size = 0x2000, scoped, tag = 'output window, operand 1']
    #allocation9 [shape = 's32[2]{0}', space=sflag, size = 0x8, scoped, tag = 'scoped memory for tpu_custom_call.1']
    %20 = vsyncpa [#allocation7], 0
    %s21 = scalar_lea.sflag [#allocation7], 1
    %22 = vsyncpa %s21, 0
    %23 = vsyncpa [#allocation9], 0
    %s24 = scalar_lea.sflag [#allocation9], 1
    %25 = vsyncpa %s24, 0
    loop: start=0, step=1, limit=4
    $region2: #{tpu_custom_call.1} parent=1 // loop_pre_header
      _
    $region3: #{tpu_custom_call.1} parent=1 // loop_header
      %s27 = sphi 0, %s31
      %p28 = scmp.ge.s32.totalorder %s27, 4
      %s34 = sphi 0, %s46
      %s35 = sphi 0, %s42
      %s36 = sphi 0, %s34
      %s37 = sphi 0, %s35
      %s38 = sphi 0, %s36
      %s39 = sphi 0, %s37
      %s51 = sphi 0, %s53
      %s54 = sphi 0, %s51
      %s55 = sphi 0, %s54
      %s71 = sphi 0, %s55
      %s79 = sphi 0, %s81
      %s82 = sphi 0, %s79
      %s83 = sphi 0, %s82
      %s99 = sphi 0, %s83
      %s103 = sphi 0, %s103
      %s105 = sphi 0, %s103
      %s106 = sphi 0, %s105
      %s120 = sphi 0, %s106
      %s124 = sphi 0, %s124
      %s126 = sphi 0, %s124
      %s127 = sphi 0, %s126
      %s141 = sphi 0, %s127
      %s145 = sphi 0, %s145
      %s147 = sphi 0, %s145
      %s148 = sphi 0, %s147
      %s162 = sphi 0, %s148
      %s166 = sphi 0, %s166
      %s168 = sphi 0, %s166
      %s169 = sphi 0, %s168
      %s183 = sphi 0, %s169
      %s187 = sphi 0, %s187
      %s189 = sphi 0, %s187
      %s190 = sphi 0, %s189
      %s204 = sphi 0, %s190
      %s208 = sphi 0, %s208
      %s210 = sphi 0, %s208
      %s211 = sphi 0, %s210
      %s225 = sphi 0, %s211
      %s229 = sphi 0, %s229
      %s231 = sphi 0, %s229
      %s232 = sphi 0, %s231
      %s246 = sphi 0, %s232
      %s250 = sphi 0, %s250
      %s252 = sphi 0, %s250
      %s253 = sphi 0, %s252
      %s267 = sphi 0, %s253
      %s271 = sphi 0, %s271
      %s273 = sphi 0, %s271
      %s274 = sphi 0, %s273
      %s288 = sphi 0, %s274
      %s292 = sphi 0, %s292
      %s294 = sphi 0, %s292
      %s295 = sphi 0, %s294
      %s309 = sphi 0, %s295
      %s313 = sphi 0, %s313
      %s315 = sphi 0, %s313
      %s316 = sphi 0, %s315
      %s330 = sphi 0, %s316
      %s338 = sphi 0, %s340
      %s341 = sphi 0, %s338
      %s342 = sphi 0, %s341
      %s358 = sphi 0, %s342
      %s366 = sphi 0, %s368
      %s369 = sphi 0, %s366
      %s370 = sphi 0, %s369
      %s386 = sphi 0, %s370
    $region4: #{tpu_custom_call.1} parent=1 // loop_header_branch
      %30 = sbr.rel (%p28) target = $region8
    $region5: #{tpu_custom_call.1} parent=1 // loop_body
      %s32 = ssub.s32 %s27, 1
      %s33 = ssub.s32 %s27, 2
      %s40 = sadd.s32 1, %s35
      %p41 = scmp.ge.s32.totalorder %s40, 1
      %s42 = scalar_select %p41, 0, %s40
      %s43 = sadd.s32 1, %s34
      %s44 = scalar_select %p41, %s43, %s34
      %p45 = scmp.ge.s32.totalorder %s44, 2
      %s46 = scalar_select %p45, 0, %s44
      %s47 = ssub.s32 %s34, %s46
      %s48 = ssub.s32 %s35, %s42
      %s49 = sor.u32 %s47, %s48
      %p50 = scmp.eq.s32.totalorder %s49, 0
      %s52 = sadd.s32 %s51, 1
      %s53 = scalar_select %p50, %s51, %s52
      %p56 = pneg %p50
      %p57 = scmp.eq.s32.totalorder %s27, 1
      %p58 = por %p56, %p57
      %p59 = scmp.ne.s32.totalorder %s51, %s54
      %p60 = scmp.eq.s32.totalorder %s27, 0
      %p61 = por %p59, %p60
      %p62 = scmp.ne.s32.totalorder %s51, %s54
      %p63 = scmp.eq.s32.totalorder %s32, 1
      %p64 = por %p62, %p63
      %p65 = scmp.ne.s32.totalorder %s54, %s55
      %p66 = scmp.eq.s32.totalorder %s32, 0
      %p67 = por %p65, %p66
      %p68 = scmp.ne.s32.totalorder %s54, %s55
      %p69 = scmp.eq.s32.totalorder %s33, 1
      %p70 = por %p68, %p69
      %p72 = scmp.ne.s32.totalorder %s55, %s71
      %p73 = scmp.eq.s32.totalorder %s33, 0
      %p74 = por %p72, %p73
      %s75 = ssub.s32 %s34, %s46
      %s76 = ssub.s32 %s35, %s42
      %s77 = sor.u32 %s75, %s76
      %p78 = scmp.eq.s32.totalorder %s77, 0
      %s80 = sadd.s32 %s79, 1
      %s81 = scalar_select %p78, %s79, %s80
      %p84 = pneg %p78
      %p85 = scmp.eq.s32.totalorder %s27, 1
      %p86 = por %p84, %p85
      %p87 = scmp.ne.s32.totalorder %s79, %s82
      %p88 = scmp.eq.s32.totalorder %s27, 0
      %p89 = por %p87, %p88
      %p90 = scmp.ne.s32.totalorder %s79, %s82
      %p91 = scmp.eq.s32.totalorder %s32, 1
      %p92 = por %p90, %p91
      %p93 = scmp.ne.s32.totalorder %s82, %s83
      %p94 = scmp.eq.s32.totalorder %s32, 0
      %p95 = por %p93, %p94
      %p96 = scmp.ne.s32.totalorder %s82, %s83
      %p97 = scmp.eq.s32.totalorder %s33, 1
      %p98 = por %p96, %p97
      %p100 = scmp.ne.s32.totalorder %s83, %s99
      %p101 = scmp.eq.s32.totalorder %s33, 0
      %p102 = por %p100, %p101
      %s104 = sadd.s32 %s103, 1
      %p107 = scmp.eq.s32.totalorder %s27, 1
      %p108 = scmp.ne.s32.totalorder %s103, %s105
      %p109 = scmp.eq.s32.totalorder %s27, 0
      %p110 = por %p108, %p109
      %p111 = scmp.ne.s32.totalorder %s103, %s105
      %p112 = scmp.eq.s32.totalorder %s32, 1
      %p113 = por %p111, %p112
      %p114 = scmp.ne.s32.totalorder %s105, %s106
      %p115 = scmp.eq.s32.totalorder %s32, 0
      %p116 = por %p114, %p115
      %p117 = scmp.ne.s32.totalorder %s105, %s106
      %p118 = scmp.eq.s32.totalorder %s33, 1
      %p119 = por %p117, %p118
      %p121 = scmp.ne.s32.totalorder %s106, %s120
      %p122 = scmp.eq.s32.totalorder %s33, 0
      %p123 = por %p121, %p122
      %s125 = sadd.s32 %s124, 1
      %p128 = scmp.eq.s32.totalorder %s27, 1
      %p129 = scmp.ne.s32.totalorder %s124, %s126
      %p130 = scmp.eq.s32.totalorder %s27, 0
      %p131 = por %p129, %p130
      %p132 = scmp.ne.s32.totalorder %s124, %s126
      %p133 = scmp.eq.s32.totalorder %s32, 1
      %p134 = por %p132, %p133
      %p135 = scmp.ne.s32.totalorder %s126, %s127
      %p136 = scmp.eq.s32.totalorder %s32, 0
      %p137 = por %p135, %p136
      %p138 = scmp.ne.s32.totalorder %s126, %s127
      %p139 = scmp.eq.s32.totalorder %s33, 1
      %p140 = por %p138, %p139
      %p142 = scmp.ne.s32.totalorder %s127, %s141
      %p143 = scmp.eq.s32.totalorder %s33, 0
      %p144 = por %p142, %p143
      %s146 = sadd.s32 %s145, 1
      %p149 = scmp.eq.s32.totalorder %s27, 1
      %p150 = scmp.ne.s32.totalorder %s145, %s147
      %p151 = scmp.eq.s32.totalorder %s27, 0
      %p152 = por %p150, %p151
      %p153 = scmp.ne.s32.totalorder %s145, %s147
      %p154 = scmp.eq.s32.totalorder %s32, 1
      %p155 = por %p153, %p154
      %p156 = scmp.ne.s32.totalorder %s147, %s148
      %p157 = scmp.eq.s32.totalorder %s32, 0
      %p158 = por %p156, %p157
      %p159 = scmp.ne.s32.totalorder %s147, %s148
      %p160 = scmp.eq.s32.totalorder %s33, 1
      %p161 = por %p159, %p160
      %p163 = scmp.ne.s32.totalorder %s148, %s162
      %p164 = scmp.eq.s32.totalorder %s33, 0
      %p165 = por %p163, %p164
      %s167 = sadd.s32 %s166, 1
      %p170 = scmp.eq.s32.totalorder %s27, 1
      %p171 = scmp.ne.s32.totalorder %s166, %s168
      %p172 = scmp.eq.s32.totalorder %s27, 0
      %p173 = por %p171, %p172
      %p174 = scmp.ne.s32.totalorder %s166, %s168
      %p175 = scmp.eq.s32.totalorder %s32, 1
      %p176 = por %p174, %p175
      %p177 = scmp.ne.s32.totalorder %s168, %s169
      %p178 = scmp.eq.s32.totalorder %s32, 0
      %p179 = por %p177, %p178
      %p180 = scmp.ne.s32.totalorder %s168, %s169
      %p181 = scmp.eq.s32.totalorder %s33, 1
      %p182 = por %p180, %p181
      %p184 = scmp.ne.s32.totalorder %s169, %s183
      %p185 = scmp.eq.s32.totalorder %s33, 0
      %p186 = por %p184, %p185
      %s188 = sadd.s32 %s187, 1
      %p191 = scmp.eq.s32.totalorder %s27, 1
      %p192 = scmp.ne.s32.totalorder %s187, %s189
      %p193 = scmp.eq.s32.totalorder %s27, 0
      %p194 = por %p192, %p193
      %p195 = scmp.ne.s32.totalorder %s187, %s189
      %p196 = scmp.eq.s32.totalorder %s32, 1
      %p197 = por %p195, %p196
      %p198 = scmp.ne.s32.totalorder %s189, %s190
      %p199 = scmp.eq.s32.totalorder %s32, 0
      %p200 = por %p198, %p199
      %p201 = scmp.ne.s32.totalorder %s189, %s190
      %p202 = scmp.eq.s32.totalorder %s33, 1
      %p203 = por %p201, %p202
      %p205 = scmp.ne.s32.totalorder %s190, %s204
      %p206 = scmp.eq.s32.totalorder %s33, 0
      %p207 = por %p205, %p206
      %s209 = sadd.s32 %s208, 1
      %p212 = scmp.eq.s32.totalorder %s27, 1
      %p213 = scmp.ne.s32.totalorder %s208, %s210
      %p214 = scmp.eq.s32.totalorder %s27, 0
      %p215 = por %p213, %p214
      %p216 = scmp.ne.s32.totalorder %s208, %s210
      %p217 = scmp.eq.s32.totalorder %s32, 1
      %p218 = por %p216, %p217
      %p219 = scmp.ne.s32.totalorder %s210, %s211
      %p220 = scmp.eq.s32.totalorder %s32, 0
      %p221 = por %p219, %p220
      %p222 = scmp.ne.s32.totalorder %s210, %s211
      %p223 = scmp.eq.s32.totalorder %s33, 1
      %p224 = por %p222, %p223
      %p226 = scmp.ne.s32.totalorder %s211, %s225
      %p227 = scmp.eq.s32.totalorder %s33, 0
      %p228 = por %p226, %p227
      %s230 = sadd.s32 %s229, 1
      %p233 = scmp.eq.s32.totalorder %s27, 1
      %p234 = scmp.ne.s32.totalorder %s229, %s231
      %p235 = scmp.eq.s32.totalorder %s27, 0
      %p236 = por %p234, %p235
      %p237 = scmp.ne.s32.totalorder %s229, %s231
      %p238 = scmp.eq.s32.totalorder %s32, 1
      %p239 = por %p237, %p238
      %p240 = scmp.ne.s32.totalorder %s231, %s232
      %p241 = scmp.eq.s32.totalorder %s32, 0
      %p242 = por %p240, %p241
      %p243 = scmp.ne.s32.totalorder %s231, %s232
      %p244 = scmp.eq.s32.totalorder %s33, 1
      %p245 = por %p243, %p244
      %p247 = scmp.ne.s32.totalorder %s232, %s246
      %p248 = scmp.eq.s32.totalorder %s33, 0
      %p249 = por %p247, %p248
      %s251 = sadd.s32 %s250, 1
      %p254 = scmp.eq.s32.totalorder %s27, 1
      %p255 = scmp.ne.s32.totalorder %s250, %s252
      %p256 = scmp.eq.s32.totalorder %s27, 0
      %p257 = por %p255, %p256
      %p258 = scmp.ne.s32.totalorder %s250, %s252
      %p259 = scmp.eq.s32.totalorder %s32, 1
      %p260 = por %p258, %p259
      %p261 = scmp.ne.s32.totalorder %s252, %s253
      %p262 = scmp.eq.s32.totalorder %s32, 0
      %p263 = por %p261, %p262
      %p264 = scmp.ne.s32.totalorder %s252, %s253
      %p265 = scmp.eq.s32.totalorder %s33, 1
      %p266 = por %p264, %p265
      %p268 = scmp.ne.s32.totalorder %s253, %s267
      %p269 = scmp.eq.s32.totalorder %s33, 0
      %p270 = por %p268, %p269
      %s272 = sadd.s32 %s271, 1
      %p275 = scmp.eq.s32.totalorder %s27, 1
      %p276 = scmp.ne.s32.totalorder %s271, %s273
      %p277 = scmp.eq.s32.totalorder %s27, 0
      %p278 = por %p276, %p277
      %p279 = scmp.ne.s32.totalorder %s271, %s273
      %p280 = scmp.eq.s32.totalorder %s32, 1
      %p281 = por %p279, %p280
      %p282 = scmp.ne.s32.totalorder %s273, %s274
      %p283 = scmp.eq.s32.totalorder %s32, 0
      %p284 = por %p282, %p283
      %p285 = scmp.ne.s32.totalorder %s273, %s274
      %p286 = scmp.eq.s32.totalorder %s33, 1
      %p287 = por %p285, %p286
      %p289 = scmp.ne.s32.totalorder %s274, %s288
      %p290 = scmp.eq.s32.totalorder %s33, 0
      %p291 = por %p289, %p290
      %s293 = sadd.s32 %s292, 1
      %p296 = scmp.eq.s32.totalorder %s27, 1
      %p297 = scmp.ne.s32.totalorder %s292, %s294
      %p298 = scmp.eq.s32.totalorder %s27, 0
      %p299 = por %p297, %p298
      %p300 = scmp.ne.s32.totalorder %s292, %s294
      %p301 = scmp.eq.s32.totalorder %s32, 1
      %p302 = por %p300, %p301
      %p303 = scmp.ne.s32.totalorder %s294, %s295
      %p304 = scmp.eq.s32.totalorder %s32, 0
      %p305 = por %p303, %p304
      %p306 = scmp.ne.s32.totalorder %s294, %s295
      %p307 = scmp.eq.s32.totalorder %s33, 1
      %p308 = por %p306, %p307
      %p310 = scmp.ne.s32.totalorder %s295, %s309
      %p311 = scmp.eq.s32.totalorder %s33, 0
      %p312 = por %p310, %p311
      %s314 = sadd.s32 %s313, 1
      %p317 = scmp.eq.s32.totalorder %s27, 1
      %p318 = scmp.ne.s32.totalorder %s313, %s315
      %p319 = scmp.eq.s32.totalorder %s27, 0
      %p320 = por %p318, %p319
      %p321 = scmp.ne.s32.totalorder %s313, %s315
      %p322 = scmp.eq.s32.totalorder %s32, 1
      %p323 = por %p321, %p322
      %p324 = scmp.ne.s32.totalorder %s315, %s316
      %p325 = scmp.eq.s32.totalorder %s32, 0
      %p326 = por %p324, %p325
      %p327 = scmp.ne.s32.totalorder %s315, %s316
      %p328 = scmp.eq.s32.totalorder %s33, 1
      %p329 = por %p327, %p328
      %p331 = scmp.ne.s32.totalorder %s316, %s330
      %p332 = scmp.eq.s32.totalorder %s33, 0
      %p333 = por %p331, %p332
      %s334 = ssub.s32 %s34, %s46
      %s335 = ssub.s32 %s35, %s42
      %s336 = sor.u32 %s334, %s335
      %p337 = scmp.eq.s32.totalorder %s336, 0
      %s339 = sadd.s32 %s338, 1
      %s340 = scalar_select %p337, %s338, %s339
      %p343 = pneg %p337
      %p344 = scmp.eq.s32.totalorder %s27, 1
      %p345 = por %p343, %p344
      %p346 = scmp.ne.s32.totalorder %s338, %s341
      %p347 = scmp.eq.s32.totalorder %s27, 0
      %p348 = por %p346, %p347
      %p349 = scmp.ne.s32.totalorder %s338, %s341
      %p350 = scmp.eq.s32.totalorder %s32, 1
      %p351 = por %p349, %p350
      %p352 = scmp.ne.s32.totalorder %s341, %s342
      %p353 = scmp.eq.s32.totalorder %s32, 0
      %p354 = por %p352, %p353
      %p355 = scmp.ne.s32.totalorder %s341, %s342
      %p356 = scmp.eq.s32.totalorder %s33, 1
      %p357 = por %p355, %p356
      %p359 = scmp.ne.s32.totalorder %s342, %s358
      %p360 = scmp.eq.s32.totalorder %s33, 0
      %p361 = por %p359, %p360
      %s362 = ssub.s32 %s34, %s46
      %s363 = ssub.s32 %s35, %s42
      %s364 = sor.u32 %s362, %s363
      %p365 = scmp.eq.s32.totalorder %s364, 0
      %s367 = sadd.s32 %s366, 1
      %s368 = scalar_select %p365, %s366, %s367
      %p371 = pneg %p365
      %p372 = scmp.eq.s32.totalorder %s27, 1
      %p373 = por %p371, %p372
      %p374 = scmp.ne.s32.totalorder %s366, %s369
      %p375 = scmp.eq.s32.totalorder %s27, 0
      %p376 = por %p374, %p375
      %p377 = scmp.ne.s32.totalorder %s366, %s369
      %p378 = scmp.eq.s32.totalorder %s32, 1
      %p379 = por %p377, %p378
      %p380 = scmp.ne.s32.totalorder %s369, %s370
      %p381 = scmp.eq.s32.totalorder %s32, 0
      %p382 = por %p380, %p381
      %p383 = scmp.ne.s32.totalorder %s369, %s370
      %p384 = scmp.eq.s32.totalorder %s33, 1
      %p385 = por %p383, %p384
      %p387 = scmp.ne.s32.totalorder %s370, %s386
      %p388 = scmp.eq.s32.totalorder %s33, 0
      %p389 = por %p387, %p388
      %p390 = scmp.le.s32.totalorder 1, %s27
      %p391 = scmp.lt.s32.totalorder %s27, 3
      %p392 = pnand %p390, %p391
      %p393 = pneg %p392
      // Predicated region
      $region9: #{tpu_custom_call.1} parent=5 // pred_check
        _
      $region10: #{tpu_custom_call.1} parent=5 // pred_check_branch
        %395 = sbr.rel (%p392) target = $region12
      $region11: #{tpu_custom_call.1} parent=5 // pred_region
        %s396 = ssub.s32 %s27, 1
        // Predicated region
        $region13: #{tpu_custom_call.1} parent=11 // pred_check
          %p397 = pneg %p116
        $region14: #{tpu_custom_call.1} parent=11 // pred_check_branch
          %399 = sbr.rel (%p397) target = $region16
        $region15: #{tpu_custom_call.1} parent=11 // pred_region
          _
        $region16: #{tpu_custom_call.1} parent=11 // pred_fallthru
          _
        // Predicated region
        $region17: #{tpu_custom_call.1} parent=11 // pred_check
          %p400 = pneg %p137
        $region18: #{tpu_custom_call.1} parent=11 // pred_check_branch
          %402 = sbr.rel (%p400) target = $region20
        $region19: #{tpu_custom_call.1} parent=11 // pred_region
          _
        $region20: #{tpu_custom_call.1} parent=11 // pred_fallthru
          _
        // Predicated region
        $region21: #{tpu_custom_call.1} parent=11 // pred_check
          %p403 = pneg %p158
        $region22: #{tpu_custom_call.1} parent=11 // pred_check_branch
          %405 = sbr.rel (%p403) target = $region24
        $region23: #{tpu_custom_call.1} parent=11 // pred_region
          _
        $region24: #{tpu_custom_call.1} parent=11 // pred_fallthru
          _
        // Predicated region
        $region25: #{tpu_custom_call.1} parent=11 // pred_check
          %p406 = pneg %p179
        $region26: #{tpu_custom_call.1} parent=11 // pred_check_branch
          %408 = sbr.rel (%p406) target = $region28
        $region27: #{tpu_custom_call.1} parent=11 // pred_region
          _
        $region28: #{tpu_custom_call.1} parent=11 // pred_fallthru
          _
        // Predicated region
        $region29: #{tpu_custom_call.1} parent=11 // pred_check
          %p409 = pneg %p200
        $region30: #{tpu_custom_call.1} parent=11 // pred_check_branch
          %411 = sbr.rel (%p409) target = $region32
        $region31: #{tpu_custom_call.1} parent=11 // pred_region
          _
        $region32: #{tpu_custom_call.1} parent=11 // pred_fallthru
          _
        // Predicated region
        $region33: #{tpu_custom_call.1} parent=11 // pred_check
          %p412 = pneg %p221
        $region34: #{tpu_custom_call.1} parent=11 // pred_check_branch
          %414 = sbr.rel (%p412) target = $region36
        $region35: #{tpu_custom_call.1} parent=11 // pred_region
          _
        $region36: #{tpu_custom_call.1} parent=11 // pred_fallthru
          _
        // Predicated region
        $region37: #{tpu_custom_call.1} parent=11 // pred_check
          %p415 = pneg %p242
        $region38: #{tpu_custom_call.1} parent=11 // pred_check_branch
          %417 = sbr.rel (%p415) target = $region40
        $region39: #{tpu_custom_call.1} parent=11 // pred_region
          _
        $region40: #{tpu_custom_call.1} parent=11 // pred_fallthru
          _
        // Predicated region
        $region41: #{tpu_custom_call.1} parent=11 // pred_check
          %p418 = pneg %p263
        $region42: #{tpu_custom_call.1} parent=11 // pred_check_branch
          %420 = sbr.rel (%p418) target = $region44
        $region43: #{tpu_custom_call.1} parent=11 // pred_region
          _
        $region44: #{tpu_custom_call.1} parent=11 // pred_fallthru
          _
        // Predicated region
        $region45: #{tpu_custom_call.1} parent=11 // pred_check
          %p421 = pneg %p284
        $region46: #{tpu_custom_call.1} parent=11 // pred_check_branch
          %423 = sbr.rel (%p421) target = $region48
        $region47: #{tpu_custom_call.1} parent=11 // pred_region
          _
        $region48: #{tpu_custom_call.1} parent=11 // pred_fallthru
          _
        // Predicated region
        $region49: #{tpu_custom_call.1} parent=11 // pred_check
          %p424 = pneg %p305
        $region50: #{tpu_custom_call.1} parent=11 // pred_check_branch
          %426 = sbr.rel (%p424) target = $region52
        $region51: #{tpu_custom_call.1} parent=11 // pred_region
          _
        $region52: #{tpu_custom_call.1} parent=11 // pred_fallthru
          _
        // Predicated region
        $region53: #{tpu_custom_call.1} parent=11 // pred_check
          %p427 = pneg %p326
        $region54: #{tpu_custom_call.1} parent=11 // pred_check_branch
          %429 = sbr.rel (%p427) target = $region56
        $region55: #{tpu_custom_call.1} parent=11 // pred_region
          _
        $region56: #{tpu_custom_call.1} parent=11 // pred_fallthru
          _
      $region12: #{tpu_custom_call.1} parent=5 // pred_fallthru
        _
      %p430 = scmp.lt.s32.totalorder %s27, 2
      // Predicated region
      $region57: #{tpu_custom_call.1} parent=5 // pred_check
        %p431 = pneg %p430
      $region58: #{tpu_custom_call.1} parent=5 // pred_check_branch
        %433 = sbr.rel (%p431) target = $region60
      $region59: #{tpu_custom_call.1} parent=5 // pred_region
        // Predicated region
        $region61: #{tpu_custom_call.1} parent=59 // pred_check
          %p434 = pneg %p61
        $region62: #{tpu_custom_call.1} parent=59 // pred_check_branch
          %436 = sbr.rel (%p434) target = $region64
        $region63: #{tpu_custom_call.1} parent=59 // pred_region
          %p437 = scmp.lt.s32.totalorder %s34, 1
          %s438 = scalar_select %p437, %s34, 1
          %p439 = scmp.lt.s32.totalorder %s35, 0
          %s440 = scalar_select %p439, %s35, 0
          %s441 = sadd.s32 %s440, %s438
          %s442 = smul.addr %s441, 8
          %s443 = scalar_lea.vmem %s0, %s442
        $region64: #{tpu_custom_call.1} parent=59 // pred_fallthru
          _
        // Predicated region
        $region65: #{tpu_custom_call.1} parent=59 // pred_check
          %p444 = pneg %p89
        $region66: #{tpu_custom_call.1} parent=59 // pred_check_branch
          %446 = sbr.rel (%p444) target = $region68
        $region67: #{tpu_custom_call.1} parent=59 // pred_region
          %p447 = scmp.lt.s32.totalorder %s34, 1
          %s448 = scalar_select %p447, %s34, 1
          %p449 = scmp.lt.s32.totalorder %s35, 0
          %s450 = scalar_select %p449, %s35, 0
          %s451 = sadd.s32 %s450, %s448
          %s452 = smul.addr %s451, 8
          %s453 = scalar_lea.vmem %s1, %s452
        $region68: #{tpu_custom_call.1} parent=59 // pred_fallthru
          _
      $region60: #{tpu_custom_call.1} parent=5 // pred_fallthru
        _
      %p454 = scmp.le.s32.totalorder 1, %s27
      %p455 = scmp.lt.s32.totalorder %s27, 3
      %p456 = pnand %p454, %p455
      %p457 = pneg %p456
      // Predicated region
      $region69: #{tpu_custom_call.1} parent=5 // pred_check
        _
      $region70: #{tpu_custom_call.1} parent=5 // pred_check_branch
        %459 = sbr.rel (%p456) target = $region72
      $region71: #{tpu_custom_call.1} parent=5 // pred_region
        %s460 = ssub.s32 %s27, 1
        %p461 = scmp.lt.s32.totalorder %s36, 1
        %s462 = scalar_select %p461, %s36, 1
        %p463 = scmp.lt.s32.totalorder %s37, 0
        %s464 = scalar_select %p463, %s37, 0
        %s465 = sadd.s32 %s464, %s462
        %s466 = smul.addr %s465, 8
        %s467 = scalar_lea.vmem %s0, %s466
        %p468 = pneg %p67
        %p469 = pneg %p64
        %p470 = scmp.lt.s32.totalorder %s36, 1
        %s471 = scalar_select %p470, %s36, 1
        %p472 = scmp.lt.s32.totalorder %s37, 0
        %s473 = scalar_select %p472, %s37, 0
        %s474 = sadd.s32 %s473, %s471
        %s475 = smul.addr %s474, 8
        %s476 = scalar_lea.vmem %s1, %s475
        %p477 = pneg %p95
        %p478 = pneg %p92
        %p479 = pneg %p116
        %p480 = pneg %p113
        %p481 = pneg %p137
        %p482 = pneg %p134
        %p483 = pneg %p158
        %p484 = pneg %p155
        %p485 = pneg %p179
        %p486 = pneg %p176
        %p487 = pneg %p200
        %p488 = pneg %p197
        %p489 = pneg %p221
        %p490 = pneg %p218
        %p491 = pneg %p242
        %p492 = pneg %p239
        %p493 = pneg %p263
        %p494 = pneg %p260
        %p495 = pneg %p284
        %p496 = pneg %p281
        %p497 = pneg %p305
        %p498 = pneg %p302
        %p499 = pneg %p326
        %p500 = pneg %p323
        %p501 = pneg %p354
        %p502 = pneg %p351
        %s503 = sand.u32 %s341, 1
        %s504 = scalar_lea.sflag [#allocation7], %s503
        %s505 = sand.u32 %s341, 1
        %s506 = smul.addr %s505, 8
        %s507 = scalar_lea.vmem [#allocation6], %s506
        %p508 = pneg %p382
        %p509 = pneg %p379
        %s510 = sand.u32 %s369, 1
        %s511 = scalar_lea.sflag [#allocation9], %s510
        %s512 = sand.u32 %s369, 1
        %s513 = smul.addr %s512, 8
        %s514 = scalar_lea.vmem [#allocation8], %s513
        %p515 = scmp.lt.s32.totalorder %s36, 1
        %s516 = scalar_select %p515, %s36, 1
        %p517 = scmp.lt.s32.totalorder %s37, 0
        %s518 = scalar_select %p517, %s37, 0
        %s519 = sadd.s32 %s518, %s516
        %s520 = smul.addr %s519, 8
        %s521 = scalar_lea.vmem %s0, %s520
        %p522 = scmp.lt.s32.totalorder %s36, 1
        %s523 = scalar_select %p522, %s36, 1
        %p524 = scmp.lt.s32.totalorder %s37, 0
        %s525 = scalar_select %p524, %s37, 0
        %s526 = sadd.s32 %s525, %s523
        %s527 = smul.addr %s526, 8
        %s528 = scalar_lea.vmem %s1, %s527
        %p530 = scmp.eq.s32.totalorder %s37, 0
        // Predicated region
        $region73: #{tpu_custom_call.1} parent=71 // pred_check
          %p531 = pneg %p530
        $region74: #{tpu_custom_call.1} parent=71 // pred_check_branch
          %533 = sbr.rel (%p531) target = $region76
        $region75: #{tpu_custom_call.1} parent=71 // pred_region
          %vm534 = vcmask 523264
          %535 = vst.msk [vmem:[#allocation2] sm:$0xff] %vm534, 0.0
          %536 = vst.msk [vmem:[#allocation2 + $0x8] sm:$0xff] %vm534, 0.0
          %vm537 = vcmask 518144
          %538 = vst.msk [vmem:[#allocation3] sm:$0x7] %vm537, 0.0
        $region76: #{tpu_custom_call.1} parent=71 // pred_fallthru
          _
        %v539 = vld [vmem:[%s521] sm:$0xff]
        %v540 = vld [vmem:[%s528] sm:$0xff]
        %v541 = vadd.f32 %v539, %v540
        %vm542 = vcmask 261120
        %543 = vst.msk [vmem:[%s514] sm:$0xff] %vm542, %v541
        %v544 = vld [vmem:[%s2] sm:$0x1]
        %v545 = vld [vmem:[%s3] sm:$0x1]
        %v546 = vsel %vm542, %v541, 0.0
        %547 = vadd.xlane.f32.xlu0 %v546
        %v548 = vpop.xlane.xlu0 %547
        %v549 = vrcp.pop 32.0
        %v550 = vmul.f32 %v548, %v549
        %v551 = vsub.f32 %v541, %v550
        %v552 = vmul.f32 %v551, %v551
        %v553 = vsel %vm542, %v552, 0.0
        %554 = vadd.xlane.f32.xlu0 %v553
        %v555 = vpop.xlane.xlu0 %554
        %v556 = vmul.f32 %v555, %v549
        %v557 = vadd.f32 %v556, 1e-05
        %v558 = vrsqrt.pop %v557
        %v559 = vmul.f32 %v551, %v558
        %v561 = vlaneseq
        %v562 = vshrl.u32 %v561, 7
        %v563 = vsub.s32 0, %v562
        %v564 = vrot.slane %v544, %v563
        %v566 = vmul.f32 %v559, %v564
        %v568 = vlaneseq
        %v569 = vshrl.u32 %v568, 7
        %v570 = vsub.s32 0, %v569
        %v571 = vrot.slane %v545, %v570
        %v573 = vadd.f32 %v566, %v571
        %v574 = vpack.c.bf16 %v573, %v573
        %v575 = vld [vmem:[%s4] sm:$0xf]
        %v576 = vld [vmem:[%s4 + $0x4] sm:$0xf]
        %v577 = vld [vmem:[%s4 + $0x8] sm:$0xf]
        %v578 = vld [vmem:[%s4 + $0xc] sm:$0xf]
        %v583 = vunpack.c.l.b16 %v575
        %v584 = vunpack.c.l.b16 %v576
        %v585 = vunpack.c.l.b16 %v577
        %v586 = vunpack.c.l.b16 %v578
        %v587 = vpack.c.b16 %v584, %v583
        %v588 = vpack.c.b16 %v586, %v585
        %v592 = vsel %vm542, %v574, 0
        %594 = vmatprep.subr.bf16.mxu0 0
        %595 = vmatpush1.bf16.msra.mxu0 %v587
        %596 = vmatprep.subr.bf16.mxu0 0
        %597 = vmatpush1.bf16.msra.mxu0 %v588
        %598 = vmatprep.subr.bf16.mxu0 0
        %599 = vmatpush1.bf16.msra.mxu0 0
        %600 = vmatprep.subr.bf16.mxu0 0
        %601 = vmatpush1.bf16.msra.mxu0 0
        %602 = vmatprep.subr.bf16.mxu0 0
        %603 = vmatpush1.bf16.msra.mxu0 0
        %604 = vmatprep.subr.bf16.mxu0 0
        %605 = vmatpush1.bf16.msra.mxu0 0
        %606 = vmatprep.subr.bf16.mxu0 0
        %607 = vmatpush1.bf16.msra.mxu0 0
        %608 = vmatprep.subr.bf16.mxu0 0
        %609 = vmatpush1.bf16.msra.mxu0 0
        %610 = vmatprep.subr.bf16.mxu0 0
        %611 = vmatpush1.bf16.msra.mxu0 0
        %612 = vmatprep.subr.bf16.mxu0 0
        %613 = vmatpush1.bf16.msra.mxu0 0
        %614 = vmatprep.subr.bf16.mxu0 0
        %615 = vmatpush1.bf16.msra.mxu0 0
        %616 = vmatprep.subr.bf16.mxu0 0
        %617 = vmatpush1.bf16.msra.mxu0 0
        %618 = vmatprep.subr.bf16.mxu0 0
        %619 = vmatpush1.bf16.msra.mxu0 0
        %620 = vmatprep.subr.bf16.mxu0 0
        %621 = vmatpush1.bf16.msra.mxu0 0
        %622 = vmatprep.subr.bf16.mxu0 0
        %623 = vmatpush1.bf16.msra.mxu0 0
        %624 = vmatprep.subr.bf16.mxu0 0
        %625 = vmatpush1.bf16.msra.mxu0 0
        %626 = vmatprep.mubr.bf16.mxu0 0
        %627 = vmatmul.mubr.bf16.gmra.mrb[0].mxu0 %v592
        %v628 = vpop.f32.mrb[0].mxu0
        %v629 = vadd.f32 0.0, %v628
        %v630 = vpop.f32.mrb[0].mxu0
        %v631 = vpop.f32.mrb[0].mxu0
        %v632 = vpop.f32.mrb[0].mxu0
        %633 = vdwg.mxu0
        %vm634 = vcmask 523264
        %635 = vst.msk [vmem:[#allocation3 + $0x3] sm:$0xff] %vm634, %v629
        %v636 = vld [vmem:[%s5] sm:$0xf]
        %v637 = vld [vmem:[#allocation3] sm:$0xff]
        %v638 = vlaneseq
        %v639 = vshrl.u32 %v638, 7
        %v640 = vsub.s32 0, %v639
        %v641 = vrot.slane %v636, %v640
        %v642 = vmul.f32 %v637, %v641
        %v643 = vadd.f32 %v642, 0.0
        %v644 = vld [vmem:[#allocation3 + $0x1] sm:$0xff]
        %v645 = vlaneseq
        %v646 = vshrl.u32 %v645, 7
        %v647 = vsub.s32 1, %v646
        %v648 = vrot.slane %v636, %v647
        %v649 = vmul.f32 %v644, %v648
        %v650 = vadd.f32 %v643, %v649
        %v651 = vld [vmem:[#allocation3 + $0x2] sm:$0xff]
        %v652 = vlaneseq
        %v653 = vshrl.u32 %v652, 7
        %v654 = vsub.s32 2, %v653
        %v655 = vrot.slane %v636, %v654
        %v656 = vmul.f32 %v651, %v655
        %v657 = vadd.f32 %v650, %v656
        %v658 = vld [vmem:[#allocation3 + $0x3] sm:$0xff]
        %v659 = vlaneseq
        %v660 = vshrl.u32 %v659, 7
        %v661 = vsub.s32 3, %v660
        %v662 = vrot.slane %v636, %v661
        %v663 = vmul.f32 %v658, %v662
        %v664 = vadd.f32 %v657, %v663
        %v665 = vld [vmem:[%s6] sm:$0x1]
        %v667 = vlaneseq
        %v668 = vshrl.u32 %v667, 7
        %v669 = vsub.s32 0, %v668
        %v670 = vrot.slane %v665, %v669
        %v672 = vadd.f32 %v664, %v670
        %v673 = vsub.f32 0.0, %v672
        %v674 = vmul.f32 %v673, 1.442695
        %v675 = vpow.pop %v674
        %v676 = vadd.f32 %v675, 1.0
        %v677 = vrcp.pop %v676
        %v678 = vmul.f32 %v672, %v677
        %v679 = vld [vmem:[#allocation3 + $0x8] sm:$0x7]
        %vm680 = vcmask 518144
        %681 = vst.msk [vmem:[#allocation3] sm:$0x7] %vm680, %v679
        %v682 = vpack.c.bf16 %v678, %v678
        %v683 = vld [vmem:[%s7] sm:$0xf]
        %v684 = vld [vmem:[%s7 + $0x4] sm:$0xf]
        %v685 = vld [vmem:[%s7 + $0x8] sm:$0xf]
        %v686 = vld [vmem:[%s7 + $0xc] sm:$0xf]
        %v687 = vld [vmem:[%s7 + $0x10] sm:$0xf]
        %v688 = vld [vmem:[%s7 + $0x14] sm:$0xf]
        %v689 = vld [vmem:[%s7 + $0x18] sm:$0xf]
        %v690 = vld [vmem:[%s7 + $0x1c] sm:$0xf]
        %v699 = vunpack.c.l.b16 %v683
        %v700 = vunpack.c.l.b16 %v684
        %v701 = vunpack.c.l.b16 %v685
        %v702 = vunpack.c.l.b16 %v686
        %v703 = vunpack.c.l.b16 %v687
        %v704 = vunpack.c.l.b16 %v688
        %v705 = vunpack.c.l.b16 %v689
        %v706 = vunpack.c.l.b16 %v690
        %v707 = vpack.c.b16 %v700, %v699
        %v708 = vpack.c.b16 %v702, %v701
        %v709 = vpack.c.b16 %v704, %v703
        %v710 = vpack.c.b16 %v706, %v705
        %v716 = vsel %vm634, %v682, 0
        %718 = vmatprep.subr.bf16.mxu0 0
        %719 = vmatpush1.bf16.msra.mxu0 %v707
        %720 = vmatprep.subr.bf16.mxu0 0
        %721 = vmatpush1.bf16.msra.mxu0 %v708
        %722 = vmatprep.subr.bf16.mxu0 0
        %723 = vmatpush1.bf16.msra.mxu0 %v709
        %724 = vmatprep.subr.bf16.mxu0 0
        %725 = vmatpush1.bf16.msra.mxu0 %v710
        %726 = vmatprep.subr.bf16.mxu0 0
        %727 = vmatpush1.bf16.msra.mxu0 0
        %728 = vmatprep.subr.bf16.mxu0 0
        %729 = vmatpush1.bf16.msra.mxu0 0
        %730 = vmatprep.subr.bf16.mxu0 0
        %731 = vmatpush1.bf16.msra.mxu0 0
        %732 = vmatprep.subr.bf16.mxu0 0
        %733 = vmatpush1.bf16.msra.mxu0 0
        %734 = vmatprep.subr.bf16.mxu0 0
        %735 = vmatpush1.bf16.msra.mxu0 0
        %736 = vmatprep.subr.bf16.mxu0 0
        %737 = vmatpush1.bf16.msra.mxu0 0
        %738 = vmatprep.subr.bf16.mxu0 0
        %739 = vmatpush1.bf16.msra.mxu0 0
        %740 = vmatprep.subr.bf16.mxu0 0
        %741 = vmatpush1.bf16.msra.mxu0 0
        %742 = vmatprep.subr.bf16.mxu0 0
        %743 = vmatpush1.bf16.msra.mxu0 0
        %744 = vmatprep.subr.bf16.mxu0 0
        %745 = vmatpush1.bf16.msra.mxu0 0
        %746 = vmatprep.subr.bf16.mxu0 0
        %747 = vmatpush1.bf16.msra.mxu0 0
        %748 = vmatprep.subr.bf16.mxu0 0
        %749 = vmatpush1.bf16.msra.mxu0 0
        %750 = vmatprep.mubr.bf16.mxu0 0
        %751 = vmatmul.mubr.bf16.gmra.mrb[0].mxu0 %v716
        %v752 = vpop.f32.mrb[0].mxu0
        %v753 = vadd.f32 0.0, %v752
        %v754 = vpop.f32.mrb[0].mxu0
        %v755 = vpop.f32.mrb[0].mxu0
        %v756 = vpop.f32.mrb[0].mxu0
        %757 = vdwg.mxu0
        %v758 = vpack.c.bf16 %v753, %v753
        %v759 = vld [vmem:[%s8] sm:$0x1]
        %v760 = vld [vmem:[%s9] sm:$0x1]
        %v762 = vlaneseq
        %v763 = vshrl.u32 %v762, 7
        %v764 = vsub.s32 0, %v763
        %v765 = vrot.slane %v760, %v764
        %vm767 = vcmask 15360
        %v769 = vsel %vm767, %v758, 0
        %vm771 = vcmask 1040384
        %v773 = vsel %vm771, %v759, 0
        %775 = vmatprep.subr.bf16.mxu0 0
        %776 = vmatpush1.bf16.msra.mxu0 %v773
        %777 = vmatprep.subr.bf16.mxu0 0
        %778 = vmatpush1.bf16.msra.mxu0 0
        %779 = vmatprep.subr.bf16.mxu0 0
        %780 = vmatpush1.bf16.msra.mxu0 0
        %781 = vmatprep.subr.bf16.mxu0 0
        %782 = vmatpush1.bf16.msra.mxu0 0
        %783 = vmatprep.subr.bf16.mxu0 0
        %784 = vmatpush1.bf16.msra.mxu0 0
        %785 = vmatprep.subr.bf16.mxu0 0
        %786 = vmatpush1.bf16.msra.mxu0 0
        %787 = vmatprep.subr.bf16.mxu0 0
        %788 = vmatpush1.bf16.msra.mxu0 0
        %789 = vmatprep.subr.bf16.mxu0 0
        %790 = vmatpush1.bf16.msra.mxu0 0
        %791 = vmatprep.subr.bf16.mxu0 0
        %792 = vmatpush1.bf16.msra.mxu0 0
        %793 = vmatprep.subr.bf16.mxu0 0
        %794 = vmatpush1.bf16.msra.mxu0 0
        %795 = vmatprep.subr.bf16.mxu0 0
        %796 = vmatpush1.bf16.msra.mxu0 0
        %797 = vmatprep.subr.bf16.mxu0 0
        %798 = vmatpush1.bf16.msra.mxu0 0
        %799 = vmatprep.subr.bf16.mxu0 0
        %800 = vmatpush1.bf16.msra.mxu0 0
        %801 = vmatprep.subr.bf16.mxu0 0
        %802 = vmatpush1.bf16.msra.mxu0 0
        %803 = vmatprep.subr.bf16.mxu0 0
        %804 = vmatpush1.bf16.msra.mxu0 0
        %805 = vmatprep.subr.bf16.mxu0 0
        %806 = vmatpush1.bf16.msra.mxu0 0
        %807 = vmatprep.mubr.bf16.mxu0 0
        %808 = vmatmul.mubr.bf16.gmra.mrb[0].mxu0 %v769
        %v809 = vpop.f32.mrb[0].mxu0
        %v810 = vadd.f32 %v765, %v809
        %v811 = vpop.f32.mrb[0].mxu0
        %v812 = vpop.f32.mrb[0].mxu0
        %v813 = vpop.f32.mrb[0].mxu0
        %814 = vdwg.mxu0
        %v815 = vmax.f32 %v810, 0.0
        %v816 = vand.u32 2147483647, %v810
        %v817 = vsub.f32 0.0, %v816
        %v818 = vmul.f32 %v817, 1.442695
        %v819 = vpow.pop %v818
        %v820 = vadd.f32 %v819, 1.0
        %v821 = vlog2.pop %v820
        %v822 = vmul.f32 %v821, 0.6931472
        %v823 = vadd.f32 %v815, %v822
        %v824 = vld [vmem:[%s10] sm:$0xff]
        %v825 = vld [vmem:[%s10 + $0x8] sm:$0xff]
        %v826 = vmul.f32 %v824, 1.442695
        %v827 = vpow.pop %v826
        %v828 = vmul.f32 %v825, 1.442695
        %v829 = vpow.pop %v828
        %v830 = vsub.f32 0.0, %v827
        %v831 = vsub.f32 0.0, %v829
        %v833 = vcombine.high %v823, %v823
        %v835 = vunpack.c.l.s4 1966171168
        %v836 = vunpack.c.0.s8 %v835
        %v837 = vlaneseq
        %v838 = vshrl.u32 %v837, 7
        %v839 = vsub.s32 %v836, %v838
        %v840 = vrot.slane %v823, %v839
        %v842 = vunpack.c.l.s4 1966171168
        %v843 = vunpack.c.0.s8 %v842
        %v844 = vlaneseq
        %v845 = vshrl.u32 %v844, 7
        %v846 = vsub.s32 %v843, %v845
        %v847 = vrot.slane %v833, %v846
        %v848 = vcombine.high %v840, %v840
        %v849 = vcombine.high %v847, %v847
        %v851 = vunpack.c.l.s4 1966171168
        %v852 = vunpack.c.0.s8 %v851
        %v853 = vlaneseq
        %v854 = vshrl.u32 %v853, 7
        %v855 = vsub.s32 %v852, %v854
        %v856 = vrot.slane %v840, %v855
        %v858 = vunpack.c.l.s4 1966171168
        %v859 = vunpack.c.0.s8 %v858
        %v860 = vlaneseq
        %v861 = vshrl.u32 %v860, 7
        %v862 = vsub.s32 %v859, %v861
        %v863 = vrot.slane %v847, %v862
        %v865 = vunpack.c.l.s4 1966171168
        %v866 = vunpack.c.0.s8 %v865
        %v867 = vlaneseq
        %v868 = vshrl.u32 %v867, 7
        %v869 = vsub.s32 %v866, %v868
        %v870 = vrot.slane %v848, %v869
        %v872 = vunpack.c.l.s4 1966171168
        %v873 = vunpack.c.0.s8 %v872
        %v874 = vlaneseq
        %v875 = vshrl.u32 %v874, 7
        %v876 = vsub.s32 %v873, %v875
        %v877 = vrot.slane %v849, %v876
        %v878 = vcombine.high %v856, %v856
        %v879 = vcombine.high %v863, %v863
        %v880 = vcombine.high %v870, %v870
        %v881 = vcombine.high %v877, %v877
        %v882 = vlaneseq
        %v883 = vshrl.u32 %v882, 7
        %v884 = vsub.s32 0, %v883
        %v885 = vrot.slane %v856, %v884
        %v886 = vlaneseq
        %v887 = vshrl.u32 %v886, 7
        %v888 = vsub.s32 0, %v887
        %v889 = vrot.slane %v870, %v888
        %v890 = vlaneseq
        %v891 = vshrl.u32 %v890, 7
        %v892 = vsub.s32 0, %v891
        %v893 = vrot.slane %v878, %v892
        %v894 = vlaneseq
        %v895 = vshrl.u32 %v894, 7
        %v896 = vsub.s32 0, %v895
        %v897 = vrot.slane %v880, %v896
        %v898 = vlaneseq
        %v899 = vshrl.u32 %v898, 7
        %v900 = vsub.s32 0, %v899
        %v901 = vrot.slane %v863, %v900
        %v902 = vlaneseq
        %v903 = vshrl.u32 %v902, 7
        %v904 = vsub.s32 0, %v903
        %v905 = vrot.slane %v877, %v904
        %v906 = vlaneseq
        %v907 = vshrl.u32 %v906, 7
        %v908 = vsub.s32 0, %v907
        %v909 = vrot.slane %v879, %v908
        %v910 = vlaneseq
        %v911 = vshrl.u32 %v910, 7
        %v912 = vsub.s32 0, %v911
        %v913 = vrot.slane %v881, %v912
        %v922 = vmul.f32 %v885, %v830
        %v923 = vmul.f32 %v885, %v831
        %v924 = vmul.f32 %v889, %v830
        %v925 = vmul.f32 %v889, %v831
        %v926 = vmul.f32 %v893, %v830
        %v927 = vmul.f32 %v893, %v831
        %v928 = vmul.f32 %v897, %v830
        %v929 = vmul.f32 %v897, %v831
        %v930 = vmul.f32 %v901, %v830
        %v931 = vmul.f32 %v901, %v831
        %v932 = vmul.f32 %v905, %v830
        %v933 = vmul.f32 %v905, %v831
        %v934 = vmul.f32 %v909, %v830
        %v935 = vmul.f32 %v909, %v831
        %v936 = vmul.f32 %v913, %v830
        %v937 = vmul.f32 %v913, %v831
        %v938 = vmul.f32 %v922, 1.442695
        %v939 = vpow.pop %v938
        %v940 = vmul.f32 %v923, 1.442695
        %v941 = vpow.pop %v940
        %v942 = vmul.f32 %v924, 1.442695
        %v943 = vpow.pop %v942
        %v944 = vmul.f32 %v925, 1.442695
        %v945 = vpow.pop %v944
        %v946 = vmul.f32 %v926, 1.442695
        %v947 = vpow.pop %v946
        %v948 = vmul.f32 %v927, 1.442695
        %v949 = vpow.pop %v948
        %v950 = vmul.f32 %v928, 1.442695
        %v951 = vpow.pop %v950
        %v952 = vmul.f32 %v929, 1.442695
        %v953 = vpow.pop %v952
        %v954 = vmul.f32 %v930, 1.442695
        %v955 = vpow.pop %v954
        %v956 = vmul.f32 %v931, 1.442695
        %v957 = vpow.pop %v956
        %v958 = vmul.f32 %v932, 1.442695
        %v959 = vpow.pop %v958
        %v960 = vmul.f32 %v933, 1.442695
        %v961 = vpow.pop %v960
        %v962 = vmul.f32 %v934, 1.442695
        %v963 = vpow.pop %v962
        %v964 = vmul.f32 %v935, 1.442695
        %v965 = vpow.pop %v964
        %v966 = vmul.f32 %v936, 1.442695
        %v967 = vpow.pop %v966
        %v968 = vmul.f32 %v937, 1.442695
        %v969 = vpow.pop %v968
        %970 = vst.msk [vmem:[#allocation4] sm:$0xff] %vm634, %v939
        %971 = vst.msk [vmem:[#allocation4 + $0x8] sm:$0xff] %vm634, %v941
        %972 = vst.msk [vmem:[#allocation4 + $0x10] sm:$0xff] %vm634, %v943
        %973 = vst.msk [vmem:[#allocation4 + $0x18] sm:$0xff] %vm634, %v945
        %974 = vst.msk [vmem:[#allocation4 + $0x20] sm:$0xff] %vm634, %v947
        %975 = vst.msk [vmem:[#allocation4 + $0x28] sm:$0xff] %vm634, %v949
        %976 = vst.msk [vmem:[#allocation4 + $0x30] sm:$0xff] %vm634, %v951
        %977 = vst.msk [vmem:[#allocation4 + $0x38] sm:$0xff] %vm634, %v953
        %978 = vst.msk [vmem:[#allocation4 + $0x40] sm:$0xff] %vm634, %v955
        %979 = vst.msk [vmem:[#allocation4 + $0x48] sm:$0xff] %vm634, %v957
        %980 = vst.msk [vmem:[#allocation4 + $0x50] sm:$0xff] %vm634, %v959
        %981 = vst.msk [vmem:[#allocation4 + $0x58] sm:$0xff] %vm634, %v961
        %982 = vst.msk [vmem:[#allocation4 + $0x60] sm:$0xff] %vm634, %v963
        %983 = vst.msk [vmem:[#allocation4 + $0x68] sm:$0xff] %vm634, %v965
        %984 = vst.msk [vmem:[#allocation4 + $0x70] sm:$0xff] %vm634, %v967
        %985 = vst.msk [vmem:[#allocation4 + $0x78] sm:$0xff] %vm634, %v969
        %v986 = vmul.f32 %v823, %v678
        %v988 = vcombine.high %v986, %v986
        %v990 = vunpack.c.l.s4 1966171168
        %v991 = vunpack.c.0.s8 %v990
        %v992 = vlaneseq
        %v993 = vshrl.u32 %v992, 7
        %v994 = vsub.s32 %v991, %v993
        %v995 = vrot.slane %v986, %v994
        %v997 = vunpack.c.l.s4 1966171168
        %v998 = vunpack.c.0.s8 %v997
        %v999 = vlaneseq
        %v1000 = vshrl.u32 %v999, 7
        %v1001 = vsub.s32 %v998, %v1000
        %v1002 = vrot.slane %v988, %v1001
        %v1003 = vcombine.high %v995, %v995
        %v1004 = vcombine.high %v1002, %v1002
        %v1006 = vunpack.c.l.s4 1966171168
        %v1007 = vunpack.c.0.s8 %v1006
        %v1008 = vlaneseq
        %v1009 = vshrl.u32 %v1008, 7
        %v1010 = vsub.s32 %v1007, %v1009
        %v1011 = vrot.slane %v995, %v1010
        %v1013 = vunpack.c.l.s4 1966171168
        %v1014 = vunpack.c.0.s8 %v1013
        %v1015 = vlaneseq
        %v1016 = vshrl.u32 %v1015, 7
        %v1017 = vsub.s32 %v1014, %v1016
        %v1018 = vrot.slane %v1002, %v1017
        %v1020 = vunpack.c.l.s4 1966171168
        %v1021 = vunpack.c.0.s8 %v1020
        %v1022 = vlaneseq
        %v1023 = vshrl.u32 %v1022, 7
        %v1024 = vsub.s32 %v1021, %v1023
        %v1025 = vrot.slane %v1003, %v1024
        %v1027 = vunpack.c.l.s4 1966171168
        %v1028 = vunpack.c.0.s8 %v1027
        %v1029 = vlaneseq
        %v1030 = vshrl.u32 %v1029, 7
        %v1031 = vsub.s32 %v1028, %v1030
        %v1032 = vrot.slane %v1004, %v1031
        %v1033 = vcombine.high %v1011, %v1011
        %v1034 = vcombine.high %v1018, %v1018
        %v1035 = vcombine.high %v1025, %v1025
        %v1036 = vcombine.high %v1032, %v1032
        %v1037 = vlaneseq
        %v1038 = vshrl.u32 %v1037, 7
        %v1039 = vsub.s32 0, %v1038
        %v1040 = vrot.slane %v753, %v1039
        %s1042 = sor.u32 256, 2
        %1043 = vbcast.lane.b32.xlu0 %v1040, %s1042
        %v1044 = vpop.permute.xlu0 %1043
        %s1046 = sor.u32 256, 10
        %1047 = vbcast.lane.b32.xlu0 %v1040, %s1046
        %v1048 = vpop.permute.xlu0 %1047
        %v1049 = vlaneseq
        %v1050 = vshrl.u32 %v1049, 7
        %v1051 = vsub.s32 1, %v1050
        %v1052 = vrot.slane %v753, %v1051
        %s1054 = sor.u32 256, 2
        %1055 = vbcast.lane.b32.xlu0 %v1052, %s1054
        %v1056 = vpop.permute.xlu0 %1055
        %s1058 = sor.u32 256, 10
        %1059 = vbcast.lane.b32.xlu0 %v1052, %s1058
        %v1060 = vpop.permute.xlu0 %1059
        %v1061 = vlaneseq
        %v1062 = vshrl.u32 %v1061, 7
        %v1063 = vsub.s32 2, %v1062
        %v1064 = vrot.slane %v753, %v1063
        %s1066 = sor.u32 256, 2
        %1067 = vbcast.lane.b32.xlu0 %v1064, %s1066
        %v1068 = vpop.permute.xlu0 %1067
        %s1070 = sor.u32 256, 10
        %1071 = vbcast.lane.b32.xlu0 %v1064, %s1070
        %v1072 = vpop.permute.xlu0 %1071
        %v1073 = vlaneseq
        %v1074 = vshrl.u32 %v1073, 7
        %v1075 = vsub.s32 3, %v1074
        %v1076 = vrot.slane %v753, %v1075
        %s1078 = sor.u32 256, 2
        %1079 = vbcast.lane.b32.xlu0 %v1076, %s1078
        %v1080 = vpop.permute.xlu0 %1079
        %s1082 = sor.u32 256, 10
        %1083 = vbcast.lane.b32.xlu0 %v1076, %s1082
        %v1084 = vpop.permute.xlu0 %1083
        %v1085 = vlaneseq
        %v1086 = vshrl.u32 %v1085, 7
        %v1087 = vsub.s32 4, %v1086
        %v1088 = vrot.slane %v753, %v1087
        %s1090 = sor.u32 256, 2
        %1091 = vbcast.lane.b32.xlu0 %v1088, %s1090
        %v1092 = vpop.permute.xlu0 %1091
        %s1094 = sor.u32 256, 10
        %1095 = vbcast.lane.b32.xlu0 %v1088, %s1094
        %v1096 = vpop.permute.xlu0 %1095
        %v1097 = vlaneseq
        %v1098 = vshrl.u32 %v1097, 7
        %v1099 = vsub.s32 5, %v1098
        %v1100 = vrot.slane %v753, %v1099
        %s1102 = sor.u32 256, 2
        %1103 = vbcast.lane.b32.xlu0 %v1100, %s1102
        %v1104 = vpop.permute.xlu0 %1103
        %s1106 = sor.u32 256, 10
        %1107 = vbcast.lane.b32.xlu0 %v1100, %s1106
        %v1108 = vpop.permute.xlu0 %1107
        %v1109 = vlaneseq
        %v1110 = vshrl.u32 %v1109, 7
        %v1111 = vsub.s32 6, %v1110
        %v1112 = vrot.slane %v753, %v1111
        %s1114 = sor.u32 256, 2
        %1115 = vbcast.lane.b32.xlu0 %v1112, %s1114
        %v1116 = vpop.permute.xlu0 %1115
        %s1118 = sor.u32 256, 10
        %1119 = vbcast.lane.b32.xlu0 %v1112, %s1118
        %v1120 = vpop.permute.xlu0 %1119
        %v1121 = vlaneseq
        %v1122 = vshrl.u32 %v1121, 7
        %v1123 = vsub.s32 7, %v1122
        %v1124 = vrot.slane %v753, %v1123
        %s1126 = sor.u32 256, 2
        %1127 = vbcast.lane.b32.xlu0 %v1124, %s1126
        %v1128 = vpop.permute.xlu0 %1127
        %s1130 = sor.u32 256, 10
        %1131 = vbcast.lane.b32.xlu0 %v1124, %s1130
        %v1132 = vpop.permute.xlu0 %1131
        %v1133 = vlaneseq
        %v1134 = vshrl.u32 %v1133, 7
        %v1135 = vsub.s32 0, %v1134
        %v1136 = vrot.slane %v1011, %v1135
        %v1137 = vlaneseq
        %v1138 = vshrl.u32 %v1137, 7
        %v1139 = vsub.s32 0, %v1138
        %v1140 = vrot.slane %v1025, %v1139
        %v1141 = vlaneseq
        %v1142 = vshrl.u32 %v1141, 7
        %v1143 = vsub.s32 0, %v1142
        %v1144 = vrot.slane %v1033, %v1143
        %v1145 = vlaneseq
        %v1146 = vshrl.u32 %v1145, 7
        %v1147 = vsub.s32 0, %v1146
        %v1148 = vrot.slane %v1035, %v1147
        %v1149 = vlaneseq
        %v1150 = vshrl.u32 %v1149, 7
        %v1151 = vsub.s32 0, %v1150
        %v1152 = vrot.slane %v1018, %v1151
        %v1153 = vlaneseq
        %v1154 = vshrl.u32 %v1153, 7
        %v1155 = vsub.s32 0, %v1154
        %v1156 = vrot.slane %v1032, %v1155
        %v1157 = vlaneseq
        %v1158 = vshrl.u32 %v1157, 7
        %v1159 = vsub.s32 0, %v1158
        %v1160 = vrot.slane %v1034, %v1159
        %v1161 = vlaneseq
        %v1162 = vshrl.u32 %v1161, 7
        %v1163 = vsub.s32 0, %v1162
        %v1164 = vrot.slane %v1036, %v1163
        %v1173 = vmul.f32 %v1136, %v1044
        %v1174 = vmul.f32 %v1136, %v1048
        %v1175 = vmul.f32 %v1140, %v1056
        %v1176 = vmul.f32 %v1140, %v1060
        %v1177 = vmul.f32 %v1144, %v1068
        %v1178 = vmul.f32 %v1144, %v1072
        %v1179 = vmul.f32 %v1148, %v1080
        %v1180 = vmul.f32 %v1148, %v1084
        %v1181 = vmul.f32 %v1152, %v1092
        %v1182 = vmul.f32 %v1152, %v1096
        %v1183 = vmul.f32 %v1156, %v1104
        %v1184 = vmul.f32 %v1156, %v1108
        %v1185 = vmul.f32 %v1160, %v1116
        %v1186 = vmul.f32 %v1160, %v1120
        %v1187 = vmul.f32 %v1164, %v1128
        %v1188 = vmul.f32 %v1164, %v1132
        %1189 = vst.msk [vmem:[#allocation5] sm:$0xff] %vm634, %v1173
        %1190 = vst.msk [vmem:[#allocation5 + $0x8] sm:$0xff] %vm634, %v1174
        %1191 = vst.msk [vmem:[#allocation5 + $0x10] sm:$0xff] %vm634, %v1175
        %1192 = vst.msk [vmem:[#allocation5 + $0x18] sm:$0xff] %vm634, %v1176
        %1193 = vst.msk [vmem:[#allocation5 + $0x20] sm:$0xff] %vm634, %v1177
        %1194 = vst.msk [vmem:[#allocation5 + $0x28] sm:$0xff] %vm634, %v1178
        %1195 = vst.msk [vmem:[#allocation5 + $0x30] sm:$0xff] %vm634, %v1179
        %1196 = vst.msk [vmem:[#allocation5 + $0x38] sm:$0xff] %vm634, %v1180
        %1197 = vst.msk [vmem:[#allocation5 + $0x40] sm:$0xff] %vm634, %v1181
        %1198 = vst.msk [vmem:[#allocation5 + $0x48] sm:$0xff] %vm634, %v1182
        %1199 = vst.msk [vmem:[#allocation5 + $0x50] sm:$0xff] %vm634, %v1183
        %1200 = vst.msk [vmem:[#allocation5 + $0x58] sm:$0xff] %vm634, %v1184
        %1201 = vst.msk [vmem:[#allocation5 + $0x60] sm:$0xff] %vm634, %v1185
        %1202 = vst.msk [vmem:[#allocation5 + $0x68] sm:$0xff] %vm634, %v1186
        %1203 = vst.msk [vmem:[#allocation5 + $0x70] sm:$0xff] %vm634, %v1187
        %1204 = vst.msk [vmem:[#allocation5 + $0x78] sm:$0xff] %vm634, %v1188
        %v1205 = vld [vmem:[#allocation2] sm:$0xff]
        %v1206 = vld [vmem:[#allocation2 + $0x8] sm:$0xff]
        loop: start=0, step=1, limit=8
        $region77: #{tpu_custom_call.1} parent=71 // loop_pre_header
          _
        $region78: #{tpu_custom_call.1} parent=71 // loop_header
          %s1208 = sphi 0, %s1212
          %p1209 = scmp.ge.s32.totalorder %s1208, 8
          %v1213 = vphi %v1205, %v1224
          %v1214 = vphi %v1206, %v1225
        $region79: #{tpu_custom_call.1} parent=71 // loop_header_branch
          %1211 = sbr.rel (%p1209) target = $region83
        $region80: #{tpu_custom_call.1} parent=71 // loop_body
          %s1215 = smul.u32 %s1208, 16
          %s1216 = scalar_lea.vmem [#allocation4], %s1215
          %v1217 = vld [vmem:[%s1216] sm:$0xff]
          %v1218 = vld [vmem:[%s1216 + $0x8] sm:$0xff]
          %v1219 = vmul.f32 %v1217, %v1213
          %v1220 = vmul.f32 %v1218, %v1214
          %s1221 = scalar_lea.vmem [#allocation5], %s1215
          %v1222 = vld [vmem:[%s1221] sm:$0xff]
          %v1223 = vld [vmem:[%s1221 + $0x8] sm:$0xff]
          %v1224 = vadd.f32 %v1219, %v1222
          %v1225 = vadd.f32 %v1220, %v1223
          %1226 = vst.msk [vmem:[%s1221] sm:$0xff] %vm634, %v1224
          %1227 = vst.msk [vmem:[%s1221 + $0x8] sm:$0xff] %vm634, %v1225
        $region81: #{tpu_custom_call.1} parent=71 // loop_footer
          %s1212 = sadd.s32 1, %s1208
        $region82: #{tpu_custom_call.1} parent=71 // loop_footer_branch
          %1207 = sbr.rel target = $region78
        $region83: #{tpu_custom_call.1} parent=71 // loop_exit
          _
        %1228 = vst.msk [vmem:[#allocation2] sm:$0xff] %vm634, %v1213
        %1229 = vst.msk [vmem:[#allocation2 + $0x8] sm:$0xff] %vm634, %v1214
        %v1230 = vld [vmem:[#allocation5] sm:$0xff]
        %v1231 = vld [vmem:[#allocation5 + $0x8] sm:$0xff]
        %v1232 = vld [vmem:[#allocation5 + $0x10] sm:$0xff]
        %v1233 = vld [vmem:[#allocation5 + $0x18] sm:$0xff]
        %v1234 = vld [vmem:[#allocation5 + $0x20] sm:$0xff]
        %v1235 = vld [vmem:[#allocation5 + $0x28] sm:$0xff]
        %v1236 = vld [vmem:[#allocation5 + $0x30] sm:$0xff]
        %v1237 = vld [vmem:[#allocation5 + $0x38] sm:$0xff]
        %v1238 = vld [vmem:[#allocation5 + $0x40] sm:$0xff]
        %v1239 = vld [vmem:[#allocation5 + $0x48] sm:$0xff]
        %v1240 = vld [vmem:[#allocation5 + $0x50] sm:$0xff]
        %v1241 = vld [vmem:[#allocation5 + $0x58] sm:$0xff]
        %v1242 = vld [vmem:[#allocation5 + $0x60] sm:$0xff]
        %v1243 = vld [vmem:[#allocation5 + $0x68] sm:$0xff]
        %v1244 = vld [vmem:[#allocation5 + $0x70] sm:$0xff]
        %v1245 = vld [vmem:[#allocation5 + $0x78] sm:$0xff]
        %s1247 = sor.u32 256, 18
        %1248 = vbcast.lane.b32.xlu0 %v1040, %s1247
        %v1249 = vpop.permute.xlu0 %1248
        %s1251 = sor.u32 256, 26
        %1252 = vbcast.lane.b32.xlu0 %v1040, %s1251
        %v1253 = vpop.permute.xlu0 %1252
        %s1255 = sor.u32 256, 18
        %1256 = vbcast.lane.b32.xlu0 %v1052, %s1255
        %v1257 = vpop.permute.xlu0 %1256
        %s1259 = sor.u32 256, 26
        %1260 = vbcast.lane.b32.xlu0 %v1052, %s1259
        %v1261 = vpop.permute.xlu0 %1260
        %s1263 = sor.u32 256, 18
        %1264 = vbcast.lane.b32.xlu0 %v1064, %s1263
        %v1265 = vpop.permute.xlu0 %1264
        %s1267 = sor.u32 256, 26
        %1268 = vbcast.lane.b32.xlu0 %v1064, %s1267
        %v1269 = vpop.permute.xlu0 %1268
        %s1271 = sor.u32 256, 18
        %1272 = vbcast.lane.b32.xlu0 %v1076, %s1271
        %v1273 = vpop.permute.xlu0 %1272
        %s1275 = sor.u32 256, 26
        %1276 = vbcast.lane.b32.xlu0 %v1076, %s1275
        %v1277 = vpop.permute.xlu0 %1276
        %s1279 = sor.u32 256, 18
        %1280 = vbcast.lane.b32.xlu0 %v1088, %s1279
        %v1281 = vpop.permute.xlu0 %1280
        %s1283 = sor.u32 256, 26
        %1284 = vbcast.lane.b32.xlu0 %v1088, %s1283
        %v1285 = vpop.permute.xlu0 %1284
        %s1287 = sor.u32 256, 18
        %1288 = vbcast.lane.b32.xlu0 %v1100, %s1287
        %v1289 = vpop.permute.xlu0 %1288
        %s1291 = sor.u32 256, 26
        %1292 = vbcast.lane.b32.xlu0 %v1100, %s1291
        %v1293 = vpop.permute.xlu0 %1292
        %s1295 = sor.u32 256, 18
        %1296 = vbcast.lane.b32.xlu0 %v1112, %s1295
        %v1297 = vpop.permute.xlu0 %1296
        %s1299 = sor.u32 256, 26
        %1300 = vbcast.lane.b32.xlu0 %v1112, %s1299
        %v1301 = vpop.permute.xlu0 %1300
        %s1303 = sor.u32 256, 18
        %1304 = vbcast.lane.b32.xlu0 %v1124, %s1303
        %v1305 = vpop.permute.xlu0 %1304
        %s1307 = sor.u32 256, 26
        %1308 = vbcast.lane.b32.xlu0 %v1124, %s1307
        %v1309 = vpop.permute.xlu0 %1308
        %v1310 = vmul.f32 %v1230, %v1249
        %v1311 = vmul.f32 %v1231, %v1253
        %v1312 = vmul.f32 %v1232, %v1257
        %v1313 = vmul.f32 %v1233, %v1261
        %v1314 = vmul.f32 %v1234, %v1265
        %v1315 = vmul.f32 %v1235, %v1269
        %v1316 = vmul.f32 %v1236, %v1273
        %v1317 = vmul.f32 %v1237, %v1277
        %v1318 = vmul.f32 %v1238, %v1281
        %v1319 = vmul.f32 %v1239, %v1285
        %v1320 = vmul.f32 %v1240, %v1289
        %v1321 = vmul.f32 %v1241, %v1293
        %v1322 = vmul.f32 %v1242, %v1297
        %v1323 = vmul.f32 %v1243, %v1301
        %v1324 = vmul.f32 %v1244, %v1305
        %v1325 = vmul.f32 %v1245, %v1309
        %v1326 = vsel %vm634, %v1310, 0.0
        %v1327 = vsel %vm634, %v1311, 0.0
        %v1328 = vadd.f32 %v1326, %v1327
        %v1329 = vrot.slane %v1328, 4
        %v1330 = vadd.f32 %v1328, %v1329
        %v1331 = vrot.slane %v1330, 2
        %v1332 = vadd.f32 %v1330, %v1331
        %v1333 = vrot.slane %v1332, 1
        %v1334 = vadd.f32 %v1332, %v1333
        %v1335 = vsel %vm634, %v1312, 0.0
        %v1336 = vsel %vm634, %v1313, 0.0
        %v1337 = vadd.f32 %v1335, %v1336
        %v1338 = vrot.slane %v1337, 4
        %v1339 = vadd.f32 %v1337, %v1338
        %v1340 = vrot.slane %v1339, 2
        %v1341 = vadd.f32 %v1339, %v1340
        %v1342 = vrot.slane %v1341, 1
        %v1343 = vadd.f32 %v1341, %v1342
        %v1344 = vsel %vm634, %v1314, 0.0
        %v1345 = vsel %vm634, %v1315, 0.0
        %v1346 = vadd.f32 %v1344, %v1345
        %v1347 = vrot.slane %v1346, 4
        %v1348 = vadd.f32 %v1346, %v1347
        %v1349 = vrot.slane %v1348, 2
        %v1350 = vadd.f32 %v1348, %v1349
        %v1351 = vrot.slane %v1350, 1
        %v1352 = vadd.f32 %v1350, %v1351
        %v1353 = vsel %vm634, %v1316, 0.0
        %v1354 = vsel %vm634, %v1317, 0.0
        %v1355 = vadd.f32 %v1353, %v1354
        %v1356 = vrot.slane %v1355, 4
        %v1357 = vadd.f32 %v1355, %v1356
        %v1358 = vrot.slane %v1357, 2
        %v1359 = vadd.f32 %v1357, %v1358
        %v1360 = vrot.slane %v1359, 1
        %v1361 = vadd.f32 %v1359, %v1360
        %v1362 = vsel %vm634, %v1318, 0.0
        %v1363 = vsel %vm634, %v1319, 0.0
        %v1364 = vadd.f32 %v1362, %v1363
        %v1365 = vrot.slane %v1364, 4
        %v1366 = vadd.f32 %v1364, %v1365
        %v1367 = vrot.slane %v1366, 2
        %v1368 = vadd.f32 %v1366, %v1367
        %v1369 = vrot.slane %v1368, 1
        %v1370 = vadd.f32 %v1368, %v1369
        %v1371 = vsel %vm634, %v1320, 0.0
        %v1372 = vsel %vm634, %v1321, 0.0
        %v1373 = vadd.f32 %v1371, %v1372
        %v1374 = vrot.slane %v1373, 4
        %v1375 = vadd.f32 %v1373, %v1374
        %v1376 = vrot.slane %v1375, 2
        %v1377 = vadd.f32 %v1375, %v1376
        %v1378 = vrot.slane %v1377, 1
        %v1379 = vadd.f32 %v1377, %v1378
        %v1380 = vsel %vm634, %v1322, 0.0
        %v1381 = vsel %vm634, %v1323, 0.0
        %v1382 = vadd.f32 %v1380, %v1381
        %v1383 = vrot.slane %v1382, 4
        %v1384 = vadd.f32 %v1382, %v1383
        %v1385 = vrot.slane %v1384, 2
        %v1386 = vadd.f32 %v1384, %v1385
        %v1387 = vrot.slane %v1386, 1
        %v1388 = vadd.f32 %v1386, %v1387
        %v1389 = vsel %vm634, %v1324, 0.0
        %v1390 = vsel %vm634, %v1325, 0.0
        %v1391 = vadd.f32 %v1389, %v1390
        %v1392 = vrot.slane %v1391, 4
        %v1393 = vadd.f32 %v1391, %v1392
        %v1394 = vrot.slane %v1393, 2
        %v1395 = vadd.f32 %v1393, %v1394
        %v1396 = vrot.slane %v1395, 1
        %v1397 = vadd.f32 %v1395, %v1396
        %v1398 = vld [vmem:[%s11] sm:$0x1]
        %v1400 = vlaneseq
        %v1401 = vshrl.u32 %v1400, 7
        %v1402 = vsub.s32 0, %v1401
        %v1403 = vrot.slane %v1398, %v1402
        %v1405 = vmul.f32 %v678, %v1403
        %v1407 = vrot.slane %v1405, 1
        %v1408 = vrot.slane %v1405, 2
        %v1409 = vrot.slane %v1405, 3
        %v1410 = vrot.slane %v1405, 4
        %v1411 = vrot.slane %v1405, 5
        %v1412 = vrot.slane %v1405, 6
        %v1413 = vrot.slane %v1405, 7
        %v1422 = vadd.f32 %v1334, %v1405
        %v1423 = vadd.f32 %v1343, %v1407
        %v1424 = vadd.f32 %v1352, %v1408
        %v1425 = vadd.f32 %v1361, %v1409
        %v1426 = vadd.f32 %v1370, %v1410
        %v1427 = vadd.f32 %v1379, %v1411
        %v1428 = vadd.f32 %v1388, %v1412
        %v1429 = vadd.f32 %v1397, %v1413
        %v1430 = vsub.f32 0.0, %v629
        %v1431 = vmul.f32 %v1430, 1.442695
        %v1432 = vpow.pop %v1431
        %v1433 = vadd.f32 %v1432, 1.0
        %v1434 = vrcp.pop %v1433
        %v1435 = vmul.f32 %v629, %v1434
        %v1437 = vrot.slane %v1435, 1
        %v1438 = vrot.slane %v1435, 2
        %v1439 = vrot.slane %v1435, 3
        %v1440 = vrot.slane %v1435, 4
        %v1441 = vrot.slane %v1435, 5
        %v1442 = vrot.slane %v1435, 6
        %v1443 = vrot.slane %v1435, 7
        %1444 = vrot.lane.b32.xlu0 %v1435, 64
        %v1445 = vpop.permute.xlu0 %1444
        %1446 = vrot.lane.b32.xlu0 %v1437, 64
        %v1447 = vpop.permute.xlu0 %1446
        %1448 = vrot.lane.b32.xlu0 %v1438, 64
        %v1449 = vpop.permute.xlu0 %1448
        %1450 = vrot.lane.b32.xlu0 %v1439, 64
        %v1451 = vpop.permute.xlu0 %1450
        %1452 = vrot.lane.b32.xlu0 %v1440, 64
        %v1453 = vpop.permute.xlu0 %1452
        %1454 = vrot.lane.b32.xlu0 %v1441, 64
        %v1455 = vpop.permute.xlu0 %1454
        %1456 = vrot.lane.b32.xlu0 %v1442, 64
        %v1457 = vpop.permute.xlu0 %1456
        %1458 = vrot.lane.b32.xlu0 %v1443, 64
        %v1459 = vpop.permute.xlu0 %1458
        %v1468 = vmul.f32 %v1422, %v1445
        %v1469 = vmul.f32 %v1423, %v1447
        %v1470 = vmul.f32 %v1424, %v1449
        %v1471 = vmul.f32 %v1425, %v1451
        %v1472 = vmul.f32 %v1426, %v1453
        %v1473 = vmul.f32 %v1427, %v1455
        %v1474 = vmul.f32 %v1428, %v1457
        %v1475 = vmul.f32 %v1429, %v1459
        %v1476 = vpack.c.bf16 %v1468, %v1468
        %v1477 = vpack.c.bf16 %v1469, %v1469
        %v1478 = vpack.c.bf16 %v1470, %v1470
        %v1479 = vpack.c.bf16 %v1471, %v1471
        %v1480 = vpack.c.bf16 %v1472, %v1472
        %v1481 = vpack.c.bf16 %v1473, %v1473
        %v1482 = vpack.c.bf16 %v1474, %v1474
        %v1483 = vpack.c.bf16 %v1475, %v1475
        %v1484 = vld [vmem:[%s12] sm:$0xf]
        %v1485 = vld [vmem:[%s12 + $0x4] sm:$0xf]
        %v1486 = vld [vmem:[%s12 + $0x8] sm:$0xf]
        %v1487 = vld [vmem:[%s12 + $0xc] sm:$0xf]
        %v1488 = vld [vmem:[%s12 + $0x10] sm:$0xf]
        %v1489 = vld [vmem:[%s12 + $0x14] sm:$0xf]
        %v1490 = vld [vmem:[%s12 + $0x18] sm:$0xf]
        %v1491 = vld [vmem:[%s12 + $0x1c] sm:$0xf]
        %v1500 = vunpack.c.l.b16 %v1476
        %v1501 = vunpack.c.l.b16 %v1477
        %v1502 = vunpack.c.l.b16 %v1478
        %v1503 = vunpack.c.l.b16 %v1479
        %v1504 = vunpack.c.l.b16 %v1480
        %v1505 = vunpack.c.l.b16 %v1481
        %v1506 = vunpack.c.l.b16 %v1482
        %v1507 = vunpack.c.l.b16 %v1483
        %v1508 = vrot.slane %v1501, 7
        %vm1509 = vcmask 1041409
        %v1510 = vsel %vm1509, %v1508, %v1500
        %v1511 = vrot.slane %v1502, 6
        %vm1512 = vcmask 1042434
        %v1513 = vsel %vm1512, %v1511, %v1510
        %v1514 = vrot.slane %v1503, 5
        %vm1515 = vcmask 1043459
        %v1516 = vsel %vm1515, %v1514, %v1513
        %v1517 = vrot.slane %v1504, 4
        %vm1518 = vcmask 1044484
        %v1519 = vsel %vm1518, %v1517, %v1516
        %v1520 = vrot.slane %v1505, 3
        %vm1521 = vcmask 1045509
        %v1522 = vsel %vm1521, %v1520, %v1519
        %v1523 = vrot.slane %v1506, 2
        %vm1524 = vcmask 1046534
        %v1525 = vsel %vm1524, %v1523, %v1522
        %v1526 = vrot.slane %v1507, 1
        %vm1527 = vcmask 1047559
        %v1528 = vsel %vm1527, %v1526, %v1525
        %v1529 = vpack.c.b16 %v1528, %v1528
        %v1538 = vunpack.c.l.b16 %v1484
        %v1539 = vunpack.c.l.b16 %v1485
        %v1540 = vunpack.c.l.b16 %v1486
        %v1541 = vunpack.c.l.b16 %v1487
        %v1542 = vunpack.c.l.b16 %v1488
        %v1543 = vunpack.c.l.b16 %v1489
        %v1544 = vunpack.c.l.b16 %v1490
        %v1545 = vunpack.c.l.b16 %v1491
        %v1546 = vpack.c.b16 %v1539, %v1538
        %v1547 = vpack.c.b16 %v1541, %v1540
        %v1548 = vpack.c.b16 %v1543, %v1542
        %v1549 = vpack.c.b16 %v1545, %v1544
        %v1555 = vsel %vm634, %v1529, 0
        %1557 = vmatprep.subr.bf16.mxu0 0
        %1558 = vmatpush1.bf16.msra.mxu0 %v1546
        %1559 = vmatprep.subr.bf16.mxu0 0
        %1560 = vmatpush1.bf16.msra.mxu0 %v1547
        %1561 = vmatprep.subr.bf16.mxu0 0
        %1562 = vmatpush1.bf16.msra.mxu0 %v1548
        %1563 = vmatprep.subr.bf16.mxu0 0
        %1564 = vmatpush1.bf16.msra.mxu0 %v1549
        %1565 = vmatprep.subr.bf16.mxu0 0
        %1566 = vmatpush1.bf16.msra.mxu0 0
        %1567 = vmatprep.subr.bf16.mxu0 0
        %1568 = vmatpush1.bf16.msra.mxu0 0
        %1569 = vmatprep.subr.bf16.mxu0 0
        %1570 = vmatpush1.bf16.msra.mxu0 0
        %1571 = vmatprep.subr.bf16.mxu0 0
        %1572 = vmatpush1.bf16.msra.mxu0 0
        %1573 = vmatprep.subr.bf16.mxu0 0
        %1574 = vmatpush1.bf16.msra.mxu0 0
        %1575 = vmatprep.subr.bf16.mxu0 0
        %1576 = vmatpush1.bf16.msra.mxu0 0
        %1577 = vmatprep.subr.bf16.mxu0 0
        %1578 = vmatpush1.bf16.msra.mxu0 0
        %1579 = vmatprep.subr.bf16.mxu0 0
        %1580 = vmatpush1.bf16.msra.mxu0 0
        %1581 = vmatprep.subr.bf16.mxu0 0
        %1582 = vmatpush1.bf16.msra.mxu0 0
        %1583 = vmatprep.subr.bf16.mxu0 0
        %1584 = vmatpush1.bf16.msra.mxu0 0
        %1585 = vmatprep.subr.bf16.mxu0 0
        %1586 = vmatpush1.bf16.msra.mxu0 0
        %1587 = vmatprep.subr.bf16.mxu0 0
        %1588 = vmatpush1.bf16.msra.mxu0 0
        %1589 = vmatprep.mubr.bf16.mxu0 0
        %1590 = vmatmul.mubr.bf16.gmra.mrb[0].mxu0 %v1555
        %v1591 = vpop.f32.mrb[0].mxu0
        %v1592 = vadd.f32 0.0, %v1591
        %v1593 = vpop.f32.mrb[0].mxu0
        %v1594 = vpop.f32.mrb[0].mxu0
        %v1595 = vpop.f32.mrb[0].mxu0
        %1596 = vdwg.mxu0
        %1597 = vst.msk [vmem:[%s507] sm:$0xff] %vm542, %v1592
        %s1598 = sand.u32 %s341, 1
        %s1599 = scalar_lea.sflag [#allocation7], %s1598
        %s1600 = sand.u32 %s341, 1
        %s1601 = smul.addr %s1600, 8
        %s1602 = scalar_lea.vmem [#allocation6], %s1601
        %s1603 = sand.u32 %s369, 1
        %s1604 = scalar_lea.sflag [#allocation9], %s1603
        %s1605 = sand.u32 %s369, 1
        %s1606 = smul.addr %s1605, 8
        %s1607 = scalar_lea.vmem [#allocation8], %s1606
        // Predicated region
        $region84: #{tpu_custom_call.1} parent=71 // pred_check
          %p1608 = pneg %p351
        $region85: #{tpu_custom_call.1} parent=71 // pred_check_branch
          %1610 = sbr.rel (%p1608) target = $region87
        $region86: #{tpu_custom_call.1} parent=71 // pred_region
          %s1612 = ssub.s32 128, 128
          %1613 = vsyncadd %s1599, %s1612
          %s1614 = sadd.s32 %s37, %s36
          %s1615 = smul.addr %s1614, 128
          %s1616 = scalar_lea.hbm %s13, %s1615
          %s1618 = sshll.u32 %s1602, 4
          %s1619 = int_to_ptr.vmem [resolvable:$true] %s1618
          %1621 = dma.vmem_to_hbm [thread:$0]  %s1619, 128, %s1616, %s1599
        $region87: #{tpu_custom_call.1} parent=71 // pred_fallthru
          _
        // Predicated region
        $region88: #{tpu_custom_call.1} parent=71 // pred_check
          %p1622 = pneg %p379
        $region89: #{tpu_custom_call.1} parent=71 // pred_check_branch
          %1624 = sbr.rel (%p1622) target = $region91
        $region90: #{tpu_custom_call.1} parent=71 // pred_region
          %s1626 = ssub.s32 128, 128
          %1627 = vsyncadd %s1604, %s1626
          %s1628 = sadd.s32 %s37, %s36
          %s1629 = smul.addr %s1628, 128
          %s1630 = scalar_lea.hbm %s14, %s1629
          %s1632 = sshll.u32 %s1607, 4
          %s1633 = int_to_ptr.vmem [resolvable:$true] %s1632
          %1635 = dma.vmem_to_hbm [thread:$0]  %s1633, 128, %s1630, %s1604
        $region91: #{tpu_custom_call.1} parent=71 // pred_fallthru
          _
      $region72: #{tpu_custom_call.1} parent=5 // pred_fallthru
        _
      %p1636 = scmp.le.s32.totalorder 2, %s27
      // Predicated region
      $region92: #{tpu_custom_call.1} parent=5 // pred_check
        %p1637 = pneg %p1636
      $region93: #{tpu_custom_call.1} parent=5 // pred_check_branch
        %1639 = sbr.rel (%p1637) target = $region95
      $region94: #{tpu_custom_call.1} parent=5 // pred_region
        %s1640 = ssub.s32 %s27, 2
        // Predicated region
        $region96: #{tpu_custom_call.1} parent=94 // pred_check
          %p1641 = pneg %p357
        $region97: #{tpu_custom_call.1} parent=94 // pred_check_branch
          %1643 = sbr.rel (%p1641) target = $region99
        $region98: #{tpu_custom_call.1} parent=94 // pred_region
          %s1644 = sand.u32 %s342, 1
          %s1645 = scalar_lea.sflag [#allocation7], %s1644
          %s1646 = sand.u32 %s342, 1
          %s1647 = smul.addr %s1646, 8
          %s1648 = scalar_lea.vmem [#allocation6], %s1647
          %1649 = dma.done %s1645, 128
        $region99: #{tpu_custom_call.1} parent=94 // pred_fallthru
          _
        // Predicated region
        $region100: #{tpu_custom_call.1} parent=94 // pred_check
          %p1650 = pneg %p385
        $region101: #{tpu_custom_call.1} parent=94 // pred_check_branch
          %1652 = sbr.rel (%p1650) target = $region103
        $region102: #{tpu_custom_call.1} parent=94 // pred_region
          %s1653 = sand.u32 %s370, 1
          %s1654 = scalar_lea.sflag [#allocation9], %s1653
          %s1655 = sand.u32 %s370, 1
          %s1656 = smul.addr %s1655, 8
          %s1657 = scalar_lea.vmem [#allocation8], %s1656
          %1658 = dma.done %s1654, 128
        $region103: #{tpu_custom_call.1} parent=94 // pred_fallthru
          _
      $region95: #{tpu_custom_call.1} parent=5 // pred_fallthru
        _
    $region6: #{tpu_custom_call.1} parent=1 // loop_footer
      %s31 = sadd.s32 1, %s27
    $region7: #{tpu_custom_call.1} parent=1 // loop_footer_branch
      %26 = sbr.rel target = $region3
    $region8: #{tpu_custom_call.1} parent=1 // loop_exit
      _
    %1659 = vsyncpa [#allocation7], 1
    %s1660 = scalar_lea.sflag [#allocation7], 1
    %1661 = vsyncpa %s1660, 1
    %1662 = vsyncpa [#allocation9], 1
    %s1663 = scalar_lea.sflag [#allocation9], 1
    %1664 = vsyncpa %s1663, 1

</llo_original>
